<compile_context>
chip_gen: v7x
topology: tpu7x:2x2x1
jax: 0.10.0
libtpu: 0.0.40
codegen_flags: <defaults>
</compile_context>

<pallas_src>
import jax
import jax.numpy as jnp
from jax import lax
from jax.experimental import pallas as pl
from jax.experimental.pallas import tpu as pltpu

# ----------------------------- config (small) --------------------------------
B, H, W = 2, 16, 16          # batch / spatial (image_dim)
NUM_BINS = 5                 # event voxel temporal bins
HID = 32                     # hidden / recurrent state channels
T_FRAMES = 3                 # number of reconstruction steps (frames)
HW = H * W                   # 256 pixels per image -> lane axis (mult. of 128)
KIN = NUM_BINS + 2           # staged rows: [event bins | prev image | ones]


# ------------------------------ Pallas kernel ---------------------------------
def recon_seq_kernel(ev_ref, w1a_ref, wsus_ref, w2_ref, b2_ref,
                     pred_ref, zin_ref, hs_ref):
    """Whole-sequence recurrence in one invocation.

    ev_ref:   (T, B, NUM_BINS, HW)  event voxels, pixels on lanes (resident)
    w1a_ref:  (HID, KIN)            packed [w1_ev | w1_img | b1]
    wsus_ref: (HID, 2*HID)          packed [Ws | Us]
    w2_ref:   (1, HID)              output head weight
    b2_ref:   (1,) SMEM             output head bias (scalar)
    pred_ref: (T, B, 1, HW)         stacked predicted images
    zin_ref:  (B, KIN, HW) VMEM     staged [ev ; prev_image ; ones]
    hs_ref:   (B, 2*HID, HW) VMEM   stacked [h ; recurrent state]
    """
    n_frames = ev_ref.shape[0]

    # states = None / prev_image = zeros initialisation (once; no frame grid).
    zin_ref[...] = jnp.zeros_like(zin_ref)                  # ev rows + prev img
    zin_ref[:, NUM_BINS + 1:NUM_BINS + 2, :] = jnp.ones(
        (B, 1, HW), jnp.float32)                            # ones row (folds b1)
    hs_ref[...] = jnp.zeros_like(hs_ref)                    # recurrent state = 0

    # Hoist weight loads out of the frame loop (loaded once).
    w1a = w1a_ref[...]          # (HID, KIN)
    wsus = wsus_ref[...]        # (HID, 2*HID)
    w2 = w2_ref[...]            # (1, HID)
    b2 = b2_ref[0]              # scalar from SMEM

    def frame(t, carry):
        ev_t = ev_ref[t]                                    # (B, NUM_BINS, HW)
        for b in range(B):                                  # B = 2, static
            # fused 1x1 conv over [event_voxel ; prev_image ; 1] + ReLU
            zin_ref[b, 0:NUM_BINS, :] = ev_t[b]
            h = jnp.maximum(
                jnp.dot(w1a, zin_ref[b],
                        preferred_element_type=jnp.float32), 0.0)   # (HID, HW)

            # recurrent update: tanh([Ws|Us] @ [h ; s])  (one K=64 matmul)
            hs_ref[b, 0:HID, :] = h
            s_new = jnp.tanh(
                jnp.dot(wsus, hs_ref[b],
                        preferred_element_type=jnp.float32))        # (HID, HW)
            hs_ref[b, HID:2 * HID, :] = s_new

            # output head: 1x1 conv to one intensity channel + sigmoid
            p = jax.nn.sigmoid(
                jnp.dot(w2, s_new, preferred_element_type=jnp.float32) + b2)
            pred_ref[t, b] = p.astype(pred_ref.dtype)       # (1, HW), lane-dense
            zin_ref[b, NUM_BINS:NUM_BINS + 1, :] = p        # feedback for t+1
        return carry

    lax.fori_loop(0, n_frames, frame, 0, unroll=True)


def _recon_seq_pallas(ev, params):
    """ev: (T, B, NUM_BINS, HW) -> preds (T, B, 1, HW)."""
    w1a, wsus, w2, b2 = params
    T = ev.shape[0]
    return pl.pallas_call(
        recon_seq_kernel,
        out_shape=jax.ShapeDtypeStruct((T, B, 1, HW), jnp.float32),
        grid_spec=pltpu.PrefetchScalarGridSpec(
            num_scalar_prefetch=0,
            grid=(1,),   # single invocation; whole problem resident in VMEM
            in_specs=[
                pl.BlockSpec((T, B, NUM_BINS, HW), lambda i: (0, 0, 0, 0)),
                pl.BlockSpec((HID, KIN), lambda i: (0, 0)),          # [w1|b1]
                pl.BlockSpec((HID, 2 * HID), lambda i: (0, 0)),      # [Ws|Us]
                pl.BlockSpec((1, HID), lambda i: (0, 0)),            # w2
                pl.BlockSpec(memory_space=pltpu.MemorySpace.SMEM),   # b2 scalar
            ],
            out_specs=pl.BlockSpec((T, B, 1, HW), lambda i: (0, 0, 0, 0)),
            scratch_shapes=[
                pltpu.VMEM((B, KIN, HW), jnp.float32),       # [ev ; prev ; 1]
                pltpu.VMEM((B, 2 * HID, HW), jnp.float32),   # [h ; state]
            ],
        ),
        compiler_params=pltpu.CompilerParams(
            dimension_semantics=("arbitrary",)),
    )(ev, w1a, wsus, w2, b2)


# ------------------------------ JAX wrapper -----------------------------------
@jax.jit
def reconstructor_forward(event_voxels, params):
    """Recurrent reconstruction over a sequence of event voxels.

    event_voxels: (T, B, NUM_BINS, H, W) float32 (NCHW per frame)
    Returns stacked predicted images (T, B, 1, H, W), mimicking the loop
    `pred_image, ..., states = self.model(input_data, states);
     prev_image = pred_image.clone()` in Reconstructor.forward.
    """
    T = event_voxels.shape[0]
    ev = event_voxels.reshape(T, B, NUM_BINS, HW)    # contiguous reshape (free)
    preds = _recon_seq_pallas(ev, params)            # (T, B, 1, HW)
    return preds.reshape(T, B, 1, H, W)              # contiguous reshape (free)


def make_params():
    """Deterministic synthetic parameters (no checkpoint loading)."""
    k = jax.random.PRNGKey(0)
    k1, k2, k3, k4, k5 = jax.random.split(k, 5)
    w1_ev = 0.1 * jax.random.normal(k1, (HID, NUM_BINS), jnp.float32)
    w1_img = 0.1 * jax.random.normal(k5, (HID, 1), jnp.float32)
    b1 = jnp.zeros((HID, 1), jnp.float32)
    w1a = jnp.concatenate([w1_ev, w1_img, b1], axis=1)       # (HID, NUM_BINS+2)
    ws = 0.1 * jax.random.normal(k2, (HID, HID), jnp.float32)
    us = 0.1 * jax.random.normal(k3, (HID, HID), jnp.float32)
    wsus = jnp.concatenate([ws, us], axis=1)                 # (HID, 2*HID)
    w2 = 0.1 * jax.random.normal(k4, (1, HID), jnp.float32)
    b2 = jnp.zeros((1,), jnp.float32)                        # SMEM scalar
    return (w1a, wsus, w2, b2)


# TODO(synk): dataset iteration (MVSEC_NE / DataLoader), events_to_voxel
# scatter, checkpoint loading, cv2 normalization, metric/CSV/image writers and
# the full DCEIFlowCistaNet / ERAFTCistaNet architectures (3x3 spatial convs,
# flow branch, gated CISTA GRU) are host-side or undefined here and are not
# translated; the recurrence is a 1x1-conv structural simplification.

if __name__ == "__main__":
    key = jax.random.PRNGKey(0)
    event_voxels = jax.random.normal(
        key, (T_FRAMES, B, NUM_BINS, H, W), jnp.float32)
    params = make_params()
    out = reconstructor_forward(event_voxels, params)
    jax.block_until_ready(out)
    assert out.shape == (T_FRAMES, B, 1, H, W)
    print("KERNEL_OK")
</pallas_src>

<mosaic_0001>
module attributes {stable_mosaic.version = 11 : i64} {
  func.func @recon_seq_kernel(%arg0: i32, %arg1: memref<3x2x5x256xf32, #tpu.memory_space<vmem>>, %arg2: memref<32x7xf32, #tpu.memory_space<vmem>>, %arg3: memref<32x64xf32, #tpu.memory_space<vmem>>, %arg4: memref<1x32xf32, #tpu.memory_space<vmem>>, %arg5: memref<1xf32, #tpu.memory_space<smem>>, %arg6: memref<3x2x1x256xf32, #tpu.memory_space<vmem>>, %arg7: memref<2x7x256xf32, #tpu.memory_space<vmem>>, %arg8: memref<2x64x256xf32, #tpu.memory_space<vmem>>) attributes {dimension_semantics = [#tpu.dimension_semantics<arbitrary>], iteration_bounds = array<i64: 1>, scalar_prefetch = 0 : i64, scratch_operands = 2 : i64, tpu.core_type = #tpu.core_type<tc>, window_params = [{pipeline_mode = #tpu.pipeline_mode<synchronous>, transform_indices = @transform_0, window_bounds = array<i64: 3, 2, 5, 256>}, {pipeline_mode = #tpu.pipeline_mode<synchronous>, transform_indices = @transform_1, window_bounds = array<i64: 32, 7>}, {pipeline_mode = #tpu.pipeline_mode<synchronous>, transform_indices = @transform_2, window_bounds = array<i64: 32, 64>}, {pipeline_mode = #tpu.pipeline_mode<synchronous>, transform_indices = @transform_3, window_bounds = array<i64: 1, 32>}, {transform_indices = @transform_4, window_bounds = array<i64: 1>}, {pipeline_mode = #tpu.pipeline_mode<synchronous>, transform_indices = @transform_5, window_bounds = array<i64: 3, 2, 1, 256>}]} {
    %cst = arith.constant 0.000000e+00 : f32
    %0 = vector.broadcast %cst : f32 to vector<2x7x256xf32>
    %c0 = arith.constant 0 : index
    %c0_0 = arith.constant 0 : index
    %c0_1 = arith.constant 0 : index
    %1 = vector.load %arg7[%c0, %c0_0, %c0_1] : memref<2x7x256xf32, #tpu.memory_space<vmem>>, vector<2x7x256xf32>
    tpu.vector_store %arg7[%c0, %c0_0, %c0_1], %0 {strides = array<i32>} : memref<2x7x256xf32, #tpu.memory_space<vmem>>, vector<2x7x256xf32>,
    %cst_2 = arith.constant 1.000000e+00 : f32
    %2 = vector.broadcast %cst_2 : f32 to vector<2x1x256xf32>
    %c0_3 = arith.constant 0 : index
    %c6 = arith.constant 6 : index
    %c0_4 = arith.constant 0 : index
    %3 = vector.load %arg7[%c0_3, %c6, %c0_4] : memref<2x7x256xf32, #tpu.memory_space<vmem>>, vector<2x1x256xf32>
    tpu.vector_store %arg7[%c0_3, %c6, %c0_4], %2 {strides = array<i32>} : memref<2x7x256xf32, #tpu.memory_space<vmem>>, vector<2x1x256xf32>,
    %cst_5 = arith.constant 0.000000e+00 : f32
    %4 = vector.broadcast %cst_5 : f32 to vector<2x64x256xf32>
    %c0_6 = arith.constant 0 : index
    %c0_7 = arith.constant 0 : index
    %c0_8 = arith.constant 0 : index
    %5 = vector.load %arg8[%c0_6, %c0_7, %c0_8] : memref<2x64x256xf32, #tpu.memory_space<vmem>>, vector<2x64x256xf32>
    tpu.vector_store %arg8[%c0_6, %c0_7, %c0_8], %4 {strides = array<i32>} : memref<2x64x256xf32, #tpu.memory_space<vmem>>, vector<2x64x256xf32>,
    %c0_9 = arith.constant 0 : index
    %c0_10 = arith.constant 0 : index
    %6 = vector.load %arg2[%c0_9, %c0_10] : memref<32x7xf32, #tpu.memory_space<vmem>>, vector<32x7xf32>
    %c0_11 = arith.constant 0 : index
    %c0_12 = arith.constant 0 : index
    %7 = vector.load %arg3[%c0_11, %c0_12] : memref<32x64xf32, #tpu.memory_space<vmem>>, vector<32x64xf32>
    %c0_13 = arith.constant 0 : index
    %c0_14 = arith.constant 0 : index
    %8 = vector.load %arg4[%c0_13, %c0_14] : memref<1x32xf32, #tpu.memory_space<vmem>>, vector<1x32xf32>
    %c0_15 = arith.constant 0 : index
    %9 = memref.load %arg5[%c0_15] : memref<1xf32, #tpu.memory_space<smem>>
    %c0_i32 = arith.constant 0 : i32
    %10 = arith.index_cast %c0_i32 : i32 to index
    %c0_16 = arith.constant 0 : index
    %c0_17 = arith.constant 0 : index
    %c0_18 = arith.constant 0 : index
    %11 = vector.load %arg1[%10, %c0_16, %c0_17, %c0_18] : memref<3x2x5x256xf32, #tpu.memory_space<vmem>>, vector<1x2x5x256xf32>
    %12 = vector.shape_cast %11 : vector<1x2x5x256xf32> to vector<2x5x256xf32>
    %13 = vector.extract_strided_slice %12 {offsets = [0, 0, 0], sizes = [1, 5, 256], strides = [1, 1, 1]} : vector<2x5x256xf32> to vector<1x5x256xf32>
    %14 = vector.shape_cast %13 : vector<1x5x256xf32> to vector<5x256xf32>
    %c0_19 = arith.constant 0 : index
    %c0_20 = arith.constant 0 : index
    %c0_21 = arith.constant 0 : index
    %15 = vector.load %arg7[%c0_19, %c0_20, %c0_21] : memref<2x7x256xf32, #tpu.memory_space<vmem>>, vector<1x5x256xf32>
    %16 = vector.shape_cast %15 : vector<1x5x256xf32> to vector<5x256xf32>
    %17 = vector.shape_cast %14 : vector<5x256xf32> to vector<1x5x256xf32>
    tpu.vector_store %arg7[%c0_19, %c0_20, %c0_21], %17 {strides = array<i32>} : memref<2x7x256xf32, #tpu.memory_space<vmem>>, vector<1x5x256xf32>,
    %c0_22 = arith.constant 0 : index
    %c0_23 = arith.constant 0 : index
    %c0_24 = arith.constant 0 : index
    %18 = vector.load %arg7[%c0_22, %c0_23, %c0_24] : memref<2x7x256xf32, #tpu.memory_space<vmem>>, vector<1x7x256xf32>
    %19 = vector.shape_cast %18 : vector<1x7x256xf32> to vector<7x256xf32>
    %cst_25 = arith.constant dense<0.000000e+00> : vector<32x256xf32>
    %20 = tpu.matmul %6, %19, %cst_25 {dimension_numbers = #tpu.dot_dimension_numbers<[1], [0], [0], [1], [0, 0, 1, 1], [], []>} : vector<32x7xf32>, vector<7x256xf32>, vector<32x256xf32> -> vector<32x256xf32>
    %cst_26 = arith.constant 0.000000e+00 : f32
    %21 = vector.broadcast %cst_26 : f32 to vector<32x256xf32>
    %22 = arith.maximumf %20, %21 : vector<32x256xf32>
    %c0_27 = arith.constant 0 : index
    %c0_28 = arith.constant 0 : index
    %c0_29 = arith.constant 0 : index
    %23 = vector.load %arg8[%c0_27, %c0_28, %c0_29] : memref<2x64x256xf32, #tpu.memory_space<vmem>>, vector<1x32x256xf32>
    %24 = vector.shape_cast %23 : vector<1x32x256xf32> to vector<32x256xf32>
    %25 = vector.shape_cast %22 : vector<32x256xf32> to vector<1x32x256xf32>
    tpu.vector_store %arg8[%c0_27, %c0_28, %c0_29], %25 {strides = array<i32>} : memref<2x64x256xf32, #tpu.memory_space<vmem>>, vector<1x32x256xf32>,
    %c0_30 = arith.constant 0 : index
    %c0_31 = arith.constant 0 : index
    %c0_32 = arith.constant 0 : index
    %26 = vector.load %arg8[%c0_30, %c0_31, %c0_32] : memref<2x64x256xf32, #tpu.memory_space<vmem>>, vector<1x64x256xf32>
    %27 = vector.shape_cast %26 : vector<1x64x256xf32> to vector<64x256xf32>
    %cst_33 = arith.constant dense<0.000000e+00> : vector<32x256xf32>
    %28 = tpu.matmul %7, %27, %cst_33 {dimension_numbers = #tpu.dot_dimension_numbers<[1], [0], [0], [1], [0, 0, 1, 1], [], []>} : vector<32x64xf32>, vector<64x256xf32>, vector<32x256xf32> -> vector<32x256xf32>
    %29 = math.tanh %28 : vector<32x256xf32>
    %c0_34 = arith.constant 0 : index
    %c32 = arith.constant 32 : index
    %c0_35 = arith.constant 0 : index
    %30 = vector.load %arg8[%c0_34, %c32, %c0_35] : memref<2x64x256xf32, #tpu.memory_space<vmem>>, vector<1x32x256xf32>
    %31 = vector.shape_cast %30 : vector<1x32x256xf32> to vector<32x256xf32>
    %32 = vector.shape_cast %29 : vector<32x256xf32> to vector<1x32x256xf32>
    tpu.vector_store %arg8[%c0_34, %c32, %c0_35], %32 {strides = array<i32>} : memref<2x64x256xf32, #tpu.memory_space<vmem>>, vector<1x32x256xf32>,
    %cst_36 = arith.constant dense<0.000000e+00> : vector<1x256xf32>
    %33 = tpu.matmul %8, %29, %cst_36 {dimension_numbers = #tpu.dot_dimension_numbers<[1], [0], [0], [1], [0, 0, 1, 1], [], []>} : vector<1x32xf32>, vector<32x256xf32>, vector<1x256xf32> -> vector<1x256xf32>
    %34 = vector.broadcast %9 : f32 to vector<1x256xf32>
    %35 = arith.addf %33, %34 : vector<1x256xf32>
    %36 = arith.negf %35 : vector<1x256xf32>
    %37 = math.exp %36 : vector<1x256xf32>
    %cst_37 = arith.constant 1.000000e+00 : f32
    %38 = vector.broadcast %cst_37 : f32 to vector<1x256xf32>
    %39 = arith.addf %38, %37 : vector<1x256xf32>
    %40 = arith.divf %38, %39 : vector<1x256xf32>
    %41 = arith.index_cast %c0_i32 : i32 to index
    %c0_38 = arith.constant 0 : index
    %c0_39 = arith.constant 0 : index
    %c0_40 = arith.constant 0 : index
    %42 = vector.load %arg6[%41, %c0_38, %c0_39, %c0_40] : memref<3x2x1x256xf32, #tpu.memory_space<vmem>>, vector<1x1x1x256xf32>
    %43 = vector.shape_cast %42 : vector<1x1x1x256xf32> to vector<1x256xf32>
    %44 = vector.shape_cast %40 : vector<1x256xf32> to vector<1x1x1x256xf32>
    tpu.vector_store %arg6[%41, %c0_38, %c0_39, %c0_40], %44 {strides = array<i32>} : memref<3x2x1x256xf32, #tpu.memory_space<vmem>>, vector<1x1x1x256xf32>,
    %c0_41 = arith.constant 0 : index
    %c5 = arith.constant 5 : index
    %c0_42 = arith.constant 0 : index
    %45 = vector.load %arg7[%c0_41, %c5, %c0_42] : memref<2x7x256xf32, #tpu.memory_space<vmem>>, vector<1x1x256xf32>
    %46 = vector.shape_cast %45 : vector<1x1x256xf32> to vector<1x256xf32>
    %47 = vector.shape_cast %40 : vector<1x256xf32> to vector<1x1x256xf32>
    tpu.vector_store %arg7[%c0_41, %c5, %c0_42], %47 {strides = array<i32>} : memref<2x7x256xf32, #tpu.memory_space<vmem>>, vector<1x1x256xf32>,
    %48 = vector.extract_strided_slice %12 {offsets = [1, 0, 0], sizes = [1, 5, 256], strides = [1, 1, 1]} : vector<2x5x256xf32> to vector<1x5x256xf32>
    %49 = vector.shape_cast %48 : vector<1x5x256xf32> to vector<5x256xf32>
    %c1 = arith.constant 1 : index
    %c0_43 = arith.constant 0 : index
    %c0_44 = arith.constant 0 : index
    %50 = vector.load %arg7[%c1, %c0_43, %c0_44] : memref<2x7x256xf32, #tpu.memory_space<vmem>>, vector<1x5x256xf32>
    %51 = vector.shape_cast %50 : vector<1x5x256xf32> to vector<5x256xf32>
    %52 = vector.shape_cast %49 : vector<5x256xf32> to vector<1x5x256xf32>
    tpu.vector_store %arg7[%c1, %c0_43, %c0_44], %52 {strides = array<i32>} : memref<2x7x256xf32, #tpu.memory_space<vmem>>, vector<1x5x256xf32>,
    %c1_45 = arith.constant 1 : index
    %c0_46 = arith.constant 0 : index
    %c0_47 = arith.constant 0 : index
    %53 = vector.load %arg7[%c1_45, %c0_46, %c0_47] : memref<2x7x256xf32, #tpu.memory_space<vmem>>, vector<1x7x256xf32>
    %54 = vector.shape_cast %53 : vector<1x7x256xf32> to vector<7x256xf32>
    %cst_48 = arith.constant dense<0.000000e+00> : vector<32x256xf32>
    %55 = tpu.matmul %6, %54, %cst_48 {dimension_numbers = #tpu.dot_dimension_numbers<[1], [0], [0], [1], [0, 0, 1, 1], [], []>} : vector<32x7xf32>, vector<7x256xf32>, vector<32x256xf32> -> vector<32x256xf32>
    %cst_49 = arith.constant 0.000000e+00 : f32
    %56 = vector.broadcast %cst_49 : f32 to vector<32x256xf32>
    %57 = arith.maximumf %55, %56 : vector<32x256xf32>
    %c1_50 = arith.constant 1 : index
    %c0_51 = arith.constant 0 : index
    %c0_52 = arith.constant 0 : index
    %58 = vector.load %arg8[%c1_50, %c0_51, %c0_52] : memref<2x64x256xf32, #tpu.memory_space<vmem>>, vector<1x32x256xf32>
    %59 = vector.shape_cast %58 : vector<1x32x256xf32> to vector<32x256xf32>
    %60 = vector.shape_cast %57 : vector<32x256xf32> to vector<1x32x256xf32>
    tpu.vector_store %arg8[%c1_50, %c0_51, %c0_52], %60 {strides = array<i32>} : memref<2x64x256xf32, #tpu.memory_space<vmem>>, vector<1x32x256xf32>,
    %c1_53 = arith.constant 1 : index
    %c0_54 = arith.constant 0 : index
    %c0_55 = arith.constant 0 : index
    %61 = vector.load %arg8[%c1_53, %c0_54, %c0_55] : memref<2x64x256xf32, #tpu.memory_space<vmem>>, vector<1x64x256xf32>
    %62 = vector.shape_cast %61 : vector<1x64x256xf32> to vector<64x256xf32>
    %cst_56 = arith.constant dense<0.000000e+00> : vector<32x256xf32>
    %63 = tpu.matmul %7, %62, %cst_56 {dimension_numbers = #tpu.dot_dimension_numbers<[1], [0], [0], [1], [0, 0, 1, 1], [], []>} : vector<32x64xf32>, vector<64x256xf32>, vector<32x256xf32> -> vector<32x256xf32>
    %64 = math.tanh %63 : vector<32x256xf32>
    %c1_57 = arith.constant 1 : index
    %c32_58 = arith.constant 32 : index
    %c0_59 = arith.constant 0 : index
    %65 = vector.load %arg8[%c1_57, %c32_58, %c0_59] : memref<2x64x256xf32, #tpu.memory_space<vmem>>, vector<1x32x256xf32>
    %66 = vector.shape_cast %65 : vector<1x32x256xf32> to vector<32x256xf32>
    %67 = vector.shape_cast %64 : vector<32x256xf32> to vector<1x32x256xf32>
    tpu.vector_store %arg8[%c1_57, %c32_58, %c0_59], %67 {strides = array<i32>} : memref<2x64x256xf32, #tpu.memory_space<vmem>>, vector<1x32x256xf32>,
    %cst_60 = arith.constant dense<0.000000e+00> : vector<1x256xf32>
    %68 = tpu.matmul %8, %64, %cst_60 {dimension_numbers = #tpu.dot_dimension_numbers<[1], [0], [0], [1], [0, 0, 1, 1], [], []>} : vector<1x32xf32>, vector<32x256xf32>, vector<1x256xf32> -> vector<1x256xf32>
    %69 = vector.broadcast %9 : f32 to vector<1x256xf32>
    %70 = arith.addf %68, %69 : vector<1x256xf32>
    %71 = arith.negf %70 : vector<1x256xf32>
    %72 = math.exp %71 : vector<1x256xf32>
    %cst_61 = arith.constant 1.000000e+00 : f32
    %73 = vector.broadcast %cst_61 : f32 to vector<1x256xf32>
    %74 = arith.addf %73, %72 : vector<1x256xf32>
    %75 = arith.divf %73, %74 : vector<1x256xf32>
    %76 = arith.index_cast %c0_i32 : i32 to index
    %c1_62 = arith.constant 1 : index
    %c0_63 = arith.constant 0 : index
    %c0_64 = arith.constant 0 : index
    %77 = vector.load %arg6[%76, %c1_62, %c0_63, %c0_64] : memref<3x2x1x256xf32, #tpu.memory_space<vmem>>, vector<1x1x1x256xf32>
    %78 = vector.shape_cast %77 : vector<1x1x1x256xf32> to vector<1x256xf32>
    %79 = vector.shape_cast %75 : vector<1x256xf32> to vector<1x1x1x256xf32>
    tpu.vector_store %arg6[%76, %c1_62, %c0_63, %c0_64], %79 {strides = array<i32>} : memref<3x2x1x256xf32, #tpu.memory_space<vmem>>, vector<1x1x1x256xf32>,
    %c1_65 = arith.constant 1 : index
    %c5_66 = arith.constant 5 : index
    %c0_67 = arith.constant 0 : index
    %80 = vector.load %arg7[%c1_65, %c5_66, %c0_67] : memref<2x7x256xf32, #tpu.memory_space<vmem>>, vector<1x1x256xf32>
    %81 = vector.shape_cast %80 : vector<1x1x256xf32> to vector<1x256xf32>
    %82 = vector.shape_cast %75 : vector<1x256xf32> to vector<1x1x256xf32>
    tpu.vector_store %arg7[%c1_65, %c5_66, %c0_67], %82 {strides = array<i32>} : memref<2x7x256xf32, #tpu.memory_space<vmem>>, vector<1x1x256xf32>,
    %c1_i32 = arith.constant 1 : i32
    %83 = arith.index_cast %c1_i32 : i32 to index
    %c0_68 = arith.constant 0 : index
    %c0_69 = arith.constant 0 : index
    %c0_70 = arith.constant 0 : index
    %84 = vector.load %arg1[%83, %c0_68, %c0_69, %c0_70] : memref<3x2x5x256xf32, #tpu.memory_space<vmem>>, vector<1x2x5x256xf32>
    %85 = vector.shape_cast %84 : vector<1x2x5x256xf32> to vector<2x5x256xf32>
    %86 = vector.extract_strided_slice %85 {offsets = [0, 0, 0], sizes = [1, 5, 256], strides = [1, 1, 1]} : vector<2x5x256xf32> to vector<1x5x256xf32>
    %87 = vector.shape_cast %86 : vector<1x5x256xf32> to vector<5x256xf32>
    %c0_71 = arith.constant 0 : index
    %c0_72 = arith.constant 0 : index
    %c0_73 = arith.constant 0 : index
    %88 = vector.load %arg7[%c0_71, %c0_72, %c0_73] : memref<2x7x256xf32, #tpu.memory_space<vmem>>, vector<1x5x256xf32>
    %89 = vector.shape_cast %88 : vector<1x5x256xf32> to vector<5x256xf32>
    %90 = vector.shape_cast %87 : vector<5x256xf32> to vector<1x5x256xf32>
    tpu.vector_store %arg7[%c0_71, %c0_72, %c0_73], %90 {strides = array<i32>} : memref<2x7x256xf32, #tpu.memory_space<vmem>>, vector<1x5x256xf32>,
    %c0_74 = arith.constant 0 : index
    %c0_75 = arith.constant 0 : index
    %c0_76 = arith.constant 0 : index
    %91 = vector.load %arg7[%c0_74, %c0_75, %c0_76] : memref<2x7x256xf32, #tpu.memory_space<vmem>>, vector<1x7x256xf32>
    %92 = vector.shape_cast %91 : vector<1x7x256xf32> to vector<7x256xf32>
    %cst_77 = arith.constant dense<0.000000e+00> : vector<32x256xf32>
    %93 = tpu.matmul %6, %92, %cst_77 {dimension_numbers = #tpu.dot_dimension_numbers<[1], [0], [0], [1], [0, 0, 1, 1], [], []>} : vector<32x7xf32>, vector<7x256xf32>, vector<32x256xf32> -> vector<32x256xf32>
    %cst_78 = arith.constant 0.000000e+00 : f32
    %94 = vector.broadcast %cst_78 : f32 to vector<32x256xf32>
    %95 = arith.maximumf %93, %94 : vector<32x256xf32>
    %c0_79 = arith.constant 0 : index
    %c0_80 = arith.constant 0 : index
    %c0_81 = arith.constant 0 : index
    %96 = vector.load %arg8[%c0_79, %c0_80, %c0_81] : memref<2x64x256xf32, #tpu.memory_space<vmem>>, vector<1x32x256xf32>
    %97 = vector.shape_cast %96 : vector<1x32x256xf32> to vector<32x256xf32>
    %98 = vector.shape_cast %95 : vector<32x256xf32> to vector<1x32x256xf32>
    tpu.vector_store %arg8[%c0_79, %c0_80, %c0_81], %98 {strides = array<i32>} : memref<2x64x256xf32, #tpu.memory_space<vmem>>, vector<1x32x256xf32>,
    %c0_82 = arith.constant 0 : index
    %c0_83 = arith.constant 0 : index
    %c0_84 = arith.constant 0 : index
    %99 = vector.load %arg8[%c0_82, %c0_83, %c0_84] : memref<2x64x256xf32, #tpu.memory_space<vmem>>, vector<1x64x256xf32>
    %100 = vector.shape_cast %99 : vector<1x64x256xf32> to vector<64x256xf32>
    %cst_85 = arith.constant dense<0.000000e+00> : vector<32x256xf32>
    %101 = tpu.matmul %7, %100, %cst_85 {dimension_numbers = #tpu.dot_dimension_numbers<[1], [0], [0], [1], [0, 0, 1, 1], [], []>} : vector<32x64xf32>, vector<64x256xf32>, vector<32x256xf32> -> vector<32x256xf32>
    %102 = math.tanh %101 : vector<32x256xf32>
    %c0_86 = arith.constant 0 : index
    %c32_87 = arith.constant 32 : index
    %c0_88 = arith.constant 0 : index
    %103 = vector.load %arg8[%c0_86, %c32_87, %c0_88] : memref<2x64x256xf32, #tpu.memory_space<vmem>>, vector<1x32x256xf32>
    %104 = vector.shape_cast %103 : vector<1x32x256xf32> to vector<32x256xf32>
    %105 = vector.shape_cast %102 : vector<32x256xf32> to vector<1x32x256xf32>
    tpu.vector_store %arg8[%c0_86, %c32_87, %c0_88], %105 {strides = array<i32>} : memref<2x64x256xf32, #tpu.memory_space<vmem>>, vector<1x32x256xf32>,
    %cst_89 = arith.constant dense<0.000000e+00> : vector<1x256xf32>
    %106 = tpu.matmul %8, %102, %cst_89 {dimension_numbers = #tpu.dot_dimension_numbers<[1], [0], [0], [1], [0, 0, 1, 1], [], []>} : vector<1x32xf32>, vector<32x256xf32>, vector<1x256xf32> -> vector<1x256xf32>
    %107 = vector.broadcast %9 : f32 to vector<1x256xf32>
    %108 = arith.addf %106, %107 : vector<1x256xf32>
    %109 = arith.negf %108 : vector<1x256xf32>
    %110 = math.exp %109 : vector<1x256xf32>
    %cst_90 = arith.constant 1.000000e+00 : f32
    %111 = vector.broadcast %cst_90 : f32 to vector<1x256xf32>
    %112 = arith.addf %111, %110 : vector<1x256xf32>
    %113 = arith.divf %111, %112 : vector<1x256xf32>
    %114 = arith.index_cast %c1_i32 : i32 to index
    %c0_91 = arith.constant 0 : index
    %c0_92 = arith.constant 0 : index
    %c0_93 = arith.constant 0 : index
    %115 = vector.load %arg6[%114, %c0_91, %c0_92, %c0_93] : memref<3x2x1x256xf32, #tpu.memory_space<vmem>>, vector<1x1x1x256xf32>
    %116 = vector.shape_cast %115 : vector<1x1x1x256xf32> to vector<1x256xf32>
    %117 = vector.shape_cast %113 : vector<1x256xf32> to vector<1x1x1x256xf32>
    tpu.vector_store %arg6[%114, %c0_91, %c0_92, %c0_93], %117 {strides = array<i32>} : memref<3x2x1x256xf32, #tpu.memory_space<vmem>>, vector<1x1x1x256xf32>,
    %c0_94 = arith.constant 0 : index
    %c5_95 = arith.constant 5 : index
    %c0_96 = arith.constant 0 : index
    %118 = vector.load %arg7[%c0_94, %c5_95, %c0_96] : memref<2x7x256xf32, #tpu.memory_space<vmem>>, vector<1x1x256xf32>
    %119 = vector.shape_cast %118 : vector<1x1x256xf32> to vector<1x256xf32>
    %120 = vector.shape_cast %113 : vector<1x256xf32> to vector<1x1x256xf32>
    tpu.vector_store %arg7[%c0_94, %c5_95, %c0_96], %120 {strides = array<i32>} : memref<2x7x256xf32, #tpu.memory_space<vmem>>, vector<1x1x256xf32>,
    %121 = vector.extract_strided_slice %85 {offsets = [1, 0, 0], sizes = [1, 5, 256], strides = [1, 1, 1]} : vector<2x5x256xf32> to vector<1x5x256xf32>
    %122 = vector.shape_cast %121 : vector<1x5x256xf32> to vector<5x256xf32>
    %c1_97 = arith.constant 1 : index
    %c0_98 = arith.constant 0 : index
    %c0_99 = arith.constant 0 : index
    %123 = vector.load %arg7[%c1_97, %c0_98, %c0_99] : memref<2x7x256xf32, #tpu.memory_space<vmem>>, vector<1x5x256xf32>
    %124 = vector.shape_cast %123 : vector<1x5x256xf32> to vector<5x256xf32>
    %125 = vector.shape_cast %122 : vector<5x256xf32> to vector<1x5x256xf32>
    tpu.vector_store %arg7[%c1_97, %c0_98, %c0_99], %125 {strides = array<i32>} : memref<2x7x256xf32, #tpu.memory_space<vmem>>, vector<1x5x256xf32>,
    %c1_100 = arith.constant 1 : index
    %c0_101 = arith.constant 0 : index
    %c0_102 = arith.constant 0 : index
    %126 = vector.load %arg7[%c1_100, %c0_101, %c0_102] : memref<2x7x256xf32, #tpu.memory_space<vmem>>, vector<1x7x256xf32>
    %127 = vector.shape_cast %126 : vector<1x7x256xf32> to vector<7x256xf32>
    %cst_103 = arith.constant dense<0.000000e+00> : vector<32x256xf32>
    %128 = tpu.matmul %6, %127, %cst_103 {dimension_numbers = #tpu.dot_dimension_numbers<[1], [0], [0], [1], [0, 0, 1, 1], [], []>} : vector<32x7xf32>, vector<7x256xf32>, vector<32x256xf32> -> vector<32x256xf32>
    %cst_104 = arith.constant 0.000000e+00 : f32
    %129 = vector.broadcast %cst_104 : f32 to vector<32x256xf32>
    %130 = arith.maximumf %128, %129 : vector<32x256xf32>
    %c1_105 = arith.constant 1 : index
    %c0_106 = arith.constant 0 : index
    %c0_107 = arith.constant 0 : index
    %131 = vector.load %arg8[%c1_105, %c0_106, %c0_107] : memref<2x64x256xf32, #tpu.memory_space<vmem>>, vector<1x32x256xf32>
    %132 = vector.shape_cast %131 : vector<1x32x256xf32> to vector<32x256xf32>
    %133 = vector.shape_cast %130 : vector<32x256xf32> to vector<1x32x256xf32>
    tpu.vector_store %arg8[%c1_105, %c0_106, %c0_107], %133 {strides = array<i32>} : memref<2x64x256xf32, #tpu.memory_space<vmem>>, vector<1x32x256xf32>,
    %c1_108 = arith.constant 1 : index
    %c0_109 = arith.constant 0 : index
    %c0_110 = arith.constant 0 : index
    %134 = vector.load %arg8[%c1_108, %c0_109, %c0_110] : memref<2x64x256xf32, #tpu.memory_space<vmem>>, vector<1x64x256xf32>
    %135 = vector.shape_cast %134 : vector<1x64x256xf32> to vector<64x256xf32>
    %cst_111 = arith.constant dense<0.000000e+00> : vector<32x256xf32>
    %136 = tpu.matmul %7, %135, %cst_111 {dimension_numbers = #tpu.dot_dimension_numbers<[1], [0], [0], [1], [0, 0, 1, 1], [], []>} : vector<32x64xf32>, vector<64x256xf32>, vector<32x256xf32> -> vector<32x256xf32>
    %137 = math.tanh %136 : vector<32x256xf32>
    %c1_112 = arith.constant 1 : index
    %c32_113 = arith.constant 32 : index
    %c0_114 = arith.constant 0 : index
    %138 = vector.load %arg8[%c1_112, %c32_113, %c0_114] : memref<2x64x256xf32, #tpu.memory_space<vmem>>, vector<1x32x256xf32>
    %139 = vector.shape_cast %138 : vector<1x32x256xf32> to vector<32x256xf32>
    %140 = vector.shape_cast %137 : vector<32x256xf32> to vector<1x32x256xf32>
    tpu.vector_store %arg8[%c1_112, %c32_113, %c0_114], %140 {strides = array<i32>} : memref<2x64x256xf32, #tpu.memory_space<vmem>>, vector<1x32x256xf32>,
    %cst_115 = arith.constant dense<0.000000e+00> : vector<1x256xf32>
    %141 = tpu.matmul %8, %137, %cst_115 {dimension_numbers = #tpu.dot_dimension_numbers<[1], [0], [0], [1], [0, 0, 1, 1], [], []>} : vector<1x32xf32>, vector<32x256xf32>, vector<1x256xf32> -> vector<1x256xf32>
    %142 = vector.broadcast %9 : f32 to vector<1x256xf32>
    %143 = arith.addf %141, %142 : vector<1x256xf32>
    %144 = arith.negf %143 : vector<1x256xf32>
    %145 = math.exp %144 : vector<1x256xf32>
    %cst_116 = arith.constant 1.000000e+00 : f32
    %146 = vector.broadcast %cst_116 : f32 to vector<1x256xf32>
    %147 = arith.addf %146, %145 : vector<1x256xf32>
    %148 = arith.divf %146, %147 : vector<1x256xf32>
    %149 = arith.index_cast %c1_i32 : i32 to index
    %c1_117 = arith.constant 1 : index
    %c0_118 = arith.constant 0 : index
    %c0_119 = arith.constant 0 : index
    %150 = vector.load %arg6[%149, %c1_117, %c0_118, %c0_119] : memref<3x2x1x256xf32, #tpu.memory_space<vmem>>, vector<1x1x1x256xf32>
    %151 = vector.shape_cast %150 : vector<1x1x1x256xf32> to vector<1x256xf32>
    %152 = vector.shape_cast %148 : vector<1x256xf32> to vector<1x1x1x256xf32>
    tpu.vector_store %arg6[%149, %c1_117, %c0_118, %c0_119], %152 {strides = array<i32>} : memref<3x2x1x256xf32, #tpu.memory_space<vmem>>, vector<1x1x1x256xf32>,
    %c1_120 = arith.constant 1 : index
    %c5_121 = arith.constant 5 : index
    %c0_122 = arith.constant 0 : index
    %153 = vector.load %arg7[%c1_120, %c5_121, %c0_122] : memref<2x7x256xf32, #tpu.memory_space<vmem>>, vector<1x1x256xf32>
    %154 = vector.shape_cast %153 : vector<1x1x256xf32> to vector<1x256xf32>
    %155 = vector.shape_cast %148 : vector<1x256xf32> to vector<1x1x256xf32>
    tpu.vector_store %arg7[%c1_120, %c5_121, %c0_122], %155 {strides = array<i32>} : memref<2x7x256xf32, #tpu.memory_space<vmem>>, vector<1x1x256xf32>,
    %c2_i32 = arith.constant 2 : i32
    %156 = arith.index_cast %c2_i32 : i32 to index
    %c0_123 = arith.constant 0 : index
    %c0_124 = arith.constant 0 : index
    %c0_125 = arith.constant 0 : index
    %157 = vector.load %arg1[%156, %c0_123, %c0_124, %c0_125] : memref<3x2x5x256xf32, #tpu.memory_space<vmem>>, vector<1x2x5x256xf32>
    %158 = vector.shape_cast %157 : vector<1x2x5x256xf32> to vector<2x5x256xf32>
    %159 = vector.extract_strided_slice %158 {offsets = [0, 0, 0], sizes = [1, 5, 256], strides = [1, 1, 1]} : vector<2x5x256xf32> to vector<1x5x256xf32>
    %160 = vector.shape_cast %159 : vector<1x5x256xf32> to vector<5x256xf32>
    %c0_126 = arith.constant 0 : index
    %c0_127 = arith.constant 0 : index
    %c0_128 = arith.constant 0 : index
    %161 = vector.load %arg7[%c0_126, %c0_127, %c0_128] : memref<2x7x256xf32, #tpu.memory_space<vmem>>, vector<1x5x256xf32>
    %162 = vector.shape_cast %161 : vector<1x5x256xf32> to vector<5x256xf32>
    %163 = vector.shape_cast %160 : vector<5x256xf32> to vector<1x5x256xf32>
    tpu.vector_store %arg7[%c0_126, %c0_127, %c0_128], %163 {strides = array<i32>} : memref<2x7x256xf32, #tpu.memory_space<vmem>>, vector<1x5x256xf32>,
    %c0_129 = arith.constant 0 : index
    %c0_130 = arith.constant 0 : index
    %c0_131 = arith.constant 0 : index
    %164 = vector.load %arg7[%c0_129, %c0_130, %c0_131] : memref<2x7x256xf32, #tpu.memory_space<vmem>>, vector<1x7x256xf32>
    %165 = vector.shape_cast %164 : vector<1x7x256xf32> to vector<7x256xf32>
    %cst_132 = arith.constant dense<0.000000e+00> : vector<32x256xf32>
    %166 = tpu.matmul %6, %165, %cst_132 {dimension_numbers = #tpu.dot_dimension_numbers<[1], [0], [0], [1], [0, 0, 1, 1], [], []>} : vector<32x7xf32>, vector<7x256xf32>, vector<32x256xf32> -> vector<32x256xf32>
    %cst_133 = arith.constant 0.000000e+00 : f32
    %167 = vector.broadcast %cst_133 : f32 to vector<32x256xf32>
    %168 = arith.maximumf %166, %167 : vector<32x256xf32>
    %c0_134 = arith.constant 0 : index
    %c0_135 = arith.constant 0 : index
    %c0_136 = arith.constant 0 : index
    %169 = vector.load %arg8[%c0_134, %c0_135, %c0_136] : memref<2x64x256xf32, #tpu.memory_space<vmem>>, vector<1x32x256xf32>
    %170 = vector.shape_cast %169 : vector<1x32x256xf32> to vector<32x256xf32>
    %171 = vector.shape_cast %168 : vector<32x256xf32> to vector<1x32x256xf32>
    tpu.vector_store %arg8[%c0_134, %c0_135, %c0_136], %171 {strides = array<i32>} : memref<2x64x256xf32, #tpu.memory_space<vmem>>, vector<1x32x256xf32>,
    %c0_137 = arith.constant 0 : index
    %c0_138 = arith.constant 0 : index
    %c0_139 = arith.constant 0 : index
    %172 = vector.load %arg8[%c0_137, %c0_138, %c0_139] : memref<2x64x256xf32, #tpu.memory_space<vmem>>, vector<1x64x256xf32>
    %173 = vector.shape_cast %172 : vector<1x64x256xf32> to vector<64x256xf32>
    %cst_140 = arith.constant dense<0.000000e+00> : vector<32x256xf32>
    %174 = tpu.matmul %7, %173, %cst_140 {dimension_numbers = #tpu.dot_dimension_numbers<[1], [0], [0], [1], [0, 0, 1, 1], [], []>} : vector<32x64xf32>, vector<64x256xf32>, vector<32x256xf32> -> vector<32x256xf32>
    %175 = math.tanh %174 : vector<32x256xf32>
    %c0_141 = arith.constant 0 : index
    %c32_142 = arith.constant 32 : index
    %c0_143 = arith.constant 0 : index
    %176 = vector.load %arg8[%c0_141, %c32_142, %c0_143] : memref<2x64x256xf32, #tpu.memory_space<vmem>>, vector<1x32x256xf32>
    %177 = vector.shape_cast %176 : vector<1x32x256xf32> to vector<32x256xf32>
    %178 = vector.shape_cast %175 : vector<32x256xf32> to vector<1x32x256xf32>
    tpu.vector_store %arg8[%c0_141, %c32_142, %c0_143], %178 {strides = array<i32>} : memref<2x64x256xf32, #tpu.memory_space<vmem>>, vector<1x32x256xf32>,
    %cst_144 = arith.constant dense<0.000000e+00> : vector<1x256xf32>
    %179 = tpu.matmul %8, %175, %cst_144 {dimension_numbers = #tpu.dot_dimension_numbers<[1], [0], [0], [1], [0, 0, 1, 1], [], []>} : vector<1x32xf32>, vector<32x256xf32>, vector<1x256xf32> -> vector<1x256xf32>
    %180 = vector.broadcast %9 : f32 to vector<1x256xf32>
    %181 = arith.addf %179, %180 : vector<1x256xf32>
    %182 = arith.negf %181 : vector<1x256xf32>
    %183 = math.exp %182 : vector<1x256xf32>
    %cst_145 = arith.constant 1.000000e+00 : f32
    %184 = vector.broadcast %cst_145 : f32 to vector<1x256xf32>
    %185 = arith.addf %184, %183 : vector<1x256xf32>
    %186 = arith.divf %184, %185 : vector<1x256xf32>
    %187 = arith.index_cast %c2_i32 : i32 to index
    %c0_146 = arith.constant 0 : index
    %c0_147 = arith.constant 0 : index
    %c0_148 = arith.constant 0 : index
    %188 = vector.load %arg6[%187, %c0_146, %c0_147, %c0_148] : memref<3x2x1x256xf32, #tpu.memory_space<vmem>>, vector<1x1x1x256xf32>
    %189 = vector.shape_cast %188 : vector<1x1x1x256xf32> to vector<1x256xf32>
    %190 = vector.shape_cast %186 : vector<1x256xf32> to vector<1x1x1x256xf32>
    tpu.vector_store %arg6[%187, %c0_146, %c0_147, %c0_148], %190 {strides = array<i32>} : memref<3x2x1x256xf32, #tpu.memory_space<vmem>>, vector<1x1x1x256xf32>,
    %c0_149 = arith.constant 0 : index
    %c5_150 = arith.constant 5 : index
    %c0_151 = arith.constant 0 : index
    %191 = vector.load %arg7[%c0_149, %c5_150, %c0_151] : memref<2x7x256xf32, #tpu.memory_space<vmem>>, vector<1x1x256xf32>
    %192 = vector.shape_cast %191 : vector<1x1x256xf32> to vector<1x256xf32>
    %193 = vector.shape_cast %186 : vector<1x256xf32> to vector<1x1x256xf32>
    tpu.vector_store %arg7[%c0_149, %c5_150, %c0_151], %193 {strides = array<i32>} : memref<2x7x256xf32, #tpu.memory_space<vmem>>, vector<1x1x256xf32>,
    %194 = vector.extract_strided_slice %158 {offsets = [1, 0, 0], sizes = [1, 5, 256], strides = [1, 1, 1]} : vector<2x5x256xf32> to vector<1x5x256xf32>
    %195 = vector.shape_cast %194 : vector<1x5x256xf32> to vector<5x256xf32>
    %c1_152 = arith.constant 1 : index
    %c0_153 = arith.constant 0 : index
    %c0_154 = arith.constant 0 : index
    %196 = vector.load %arg7[%c1_152, %c0_153, %c0_154] : memref<2x7x256xf32, #tpu.memory_space<vmem>>, vector<1x5x256xf32>
    %197 = vector.shape_cast %196 : vector<1x5x256xf32> to vector<5x256xf32>
    %198 = vector.shape_cast %195 : vector<5x256xf32> to vector<1x5x256xf32>
    tpu.vector_store %arg7[%c1_152, %c0_153, %c0_154], %198 {strides = array<i32>} : memref<2x7x256xf32, #tpu.memory_space<vmem>>, vector<1x5x256xf32>,
    %c1_155 = arith.constant 1 : index
    %c0_156 = arith.constant 0 : index
    %c0_157 = arith.constant 0 : index
    %199 = vector.load %arg7[%c1_155, %c0_156, %c0_157] : memref<2x7x256xf32, #tpu.memory_space<vmem>>, vector<1x7x256xf32>
    %200 = vector.shape_cast %199 : vector<1x7x256xf32> to vector<7x256xf32>
    %cst_158 = arith.constant dense<0.000000e+00> : vector<32x256xf32>
    %201 = tpu.matmul %6, %200, %cst_158 {dimension_numbers = #tpu.dot_dimension_numbers<[1], [0], [0], [1], [0, 0, 1, 1], [], []>} : vector<32x7xf32>, vector<7x256xf32>, vector<32x256xf32> -> vector<32x256xf32>
    %cst_159 = arith.constant 0.000000e+00 : f32
    %202 = vector.broadcast %cst_159 : f32 to vector<32x256xf32>
    %203 = arith.maximumf %201, %202 : vector<32x256xf32>
    %c1_160 = arith.constant 1 : index
    %c0_161 = arith.constant 0 : index
    %c0_162 = arith.constant 0 : index
    %204 = vector.load %arg8[%c1_160, %c0_161, %c0_162] : memref<2x64x256xf32, #tpu.memory_space<vmem>>, vector<1x32x256xf32>
    %205 = vector.shape_cast %204 : vector<1x32x256xf32> to vector<32x256xf32>
    %206 = vector.shape_cast %203 : vector<32x256xf32> to vector<1x32x256xf32>
    tpu.vector_store %arg8[%c1_160, %c0_161, %c0_162], %206 {strides = array<i32>} : memref<2x64x256xf32, #tpu.memory_space<vmem>>, vector<1x32x256xf32>,
    %c1_163 = arith.constant 1 : index
    %c0_164 = arith.constant 0 : index
    %c0_165 = arith.constant 0 : index
    %207 = vector.load %arg8[%c1_163, %c0_164, %c0_165] : memref<2x64x256xf32, #tpu.memory_space<vmem>>, vector<1x64x256xf32>
    %208 = vector.shape_cast %207 : vector<1x64x256xf32> to vector<64x256xf32>
    %cst_166 = arith.constant dense<0.000000e+00> : vector<32x256xf32>
    %209 = tpu.matmul %7, %208, %cst_166 {dimension_numbers = #tpu.dot_dimension_numbers<[1], [0], [0], [1], [0, 0, 1, 1], [], []>} : vector<32x64xf32>, vector<64x256xf32>, vector<32x256xf32> -> vector<32x256xf32>
    %210 = math.tanh %209 : vector<32x256xf32>
    %c1_167 = arith.constant 1 : index
    %c32_168 = arith.constant 32 : index
    %c0_169 = arith.constant 0 : index
    %211 = vector.load %arg8[%c1_167, %c32_168, %c0_169] : memref<2x64x256xf32, #tpu.memory_space<vmem>>, vector<1x32x256xf32>
    %212 = vector.shape_cast %211 : vector<1x32x256xf32> to vector<32x256xf32>
    %213 = vector.shape_cast %210 : vector<32x256xf32> to vector<1x32x256xf32>
    tpu.vector_store %arg8[%c1_167, %c32_168, %c0_169], %213 {strides = array<i32>} : memref<2x64x256xf32, #tpu.memory_space<vmem>>, vector<1x32x256xf32>,
    %cst_170 = arith.constant dense<0.000000e+00> : vector<1x256xf32>
    %214 = tpu.matmul %8, %210, %cst_170 {dimension_numbers = #tpu.dot_dimension_numbers<[1], [0], [0], [1], [0, 0, 1, 1], [], []>} : vector<1x32xf32>, vector<32x256xf32>, vector<1x256xf32> -> vector<1x256xf32>
    %215 = vector.broadcast %9 : f32 to vector<1x256xf32>
    %216 = arith.addf %214, %215 : vector<1x256xf32>
    %217 = arith.negf %216 : vector<1x256xf32>
    %218 = math.exp %217 : vector<1x256xf32>
    %cst_171 = arith.constant 1.000000e+00 : f32
    %219 = vector.broadcast %cst_171 : f32 to vector<1x256xf32>
    %220 = arith.addf %219, %218 : vector<1x256xf32>
    %221 = arith.divf %219, %220 : vector<1x256xf32>
    %222 = arith.index_cast %c2_i32 : i32 to index
    %c1_172 = arith.constant 1 : index
    %c0_173 = arith.constant 0 : index
    %c0_174 = arith.constant 0 : index
    %223 = vector.load %arg6[%222, %c1_172, %c0_173, %c0_174] : memref<3x2x1x256xf32, #tpu.memory_space<vmem>>, vector<1x1x1x256xf32>
    %224 = vector.shape_cast %223 : vector<1x1x1x256xf32> to vector<1x256xf32>
    %225 = vector.shape_cast %221 : vector<1x256xf32> to vector<1x1x1x256xf32>
    tpu.vector_store %arg6[%222, %c1_172, %c0_173, %c0_174], %225 {strides = array<i32>} : memref<3x2x1x256xf32, #tpu.memory_space<vmem>>, vector<1x1x1x256xf32>,
    %c1_175 = arith.constant 1 : index
    %c5_176 = arith.constant 5 : index
    %c0_177 = arith.constant 0 : index
    %226 = vector.load %arg7[%c1_175, %c5_176, %c0_177] : memref<2x7x256xf32, #tpu.memory_space<vmem>>, vector<1x1x256xf32>
    %227 = vector.shape_cast %226 : vector<1x1x256xf32> to vector<1x256xf32>
    %228 = vector.shape_cast %221 : vector<1x256xf32> to vector<1x1x256xf32>
    tpu.vector_store %arg7[%c1_175, %c5_176, %c0_177], %228 {strides = array<i32>} : memref<2x7x256xf32, #tpu.memory_space<vmem>>, vector<1x1x256xf32>,
    %c3_i32 = arith.constant 3 : i32
    return
  }
  func.func @transform_0(%arg0: i32) -> (i32, i32, i32, i32) {
    %c0_i32 = arith.constant 0 : i32
    %c0_i32_0 = arith.constant 0 : i32
    %c0_i32_1 = arith.constant 0 : i32
    %c0_i32_2 = arith.constant 0 : i32
    %c0_i32_3 = arith.constant 0 : i32
    return %c0_i32, %c0_i32_0, %c0_i32_1, %c0_i32_2 : i32, i32, i32, i32
  }
  func.func @transform_1(%arg0: i32) -> (i32, i32) {
    %c0_i32 = arith.constant 0 : i32
    %c0_i32_0 = arith.constant 0 : i32
    %c0_i32_1 = arith.constant 0 : i32
    return %c0_i32, %c0_i32_0 : i32, i32
  }
  func.func @transform_2(%arg0: i32) -> (i32, i32) {
    %c0_i32 = arith.constant 0 : i32
    %c0_i32_0 = arith.constant 0 : i32
    %c0_i32_1 = arith.constant 0 : i32
    return %c0_i32, %c0_i32_0 : i32, i32
  }
  func.func @transform_3(%arg0: i32) -> (i32, i32) {
    %c0_i32 = arith.constant 0 : i32
    %c0_i32_0 = arith.constant 0 : i32
    %c0_i32_1 = arith.constant 0 : i32
    return %c0_i32, %c0_i32_0 : i32, i32
  }
  func.func @transform_4(%arg0: i32) -> i32 {
    %c0_i32 = arith.constant 0 : i32
    %c0_i32_0 = arith.constant 0 : i32
    return %c0_i32 : i32
  }
  func.func @transform_5(%arg0: i32) -> (i32, i32, i32, i32) {
    %c0_i32 = arith.constant 0 : i32
    %c0_i32_0 = arith.constant 0 : i32
    %c0_i32_1 = arith.constant 0 : i32
    %c0_i32_2 = arith.constant 0 : i32
    %c0_i32_3 = arith.constant 0 : i32
    return %c0_i32, %c0_i32_0, %c0_i32_1, %c0_i32_2 : i32, i32, i32, i32
  }
}

</mosaic_0001>

<llo_original>
// kernel: reconstructor_forward.1
$region0: #{reconstructor_forward.1}
  #allocation0 [shape = 'u32[]', space=smem, size = 0x4, offset = 0x4, fixed_abs, tag = 'smem constant byte address 0x4 - core index']
  #allocation1 [shape = 'u32[144,128]{1,0:T(1,128)}', space=vmem, size = 0x12000, scoped, tag = 'internal scratch']
  #allocation2 [shape = 'f32[2,7,256]{2,1,0:T(8,128)}', space=vmem, size = 0x4000, scoped, tag = 'scratch operand']
  #allocation3 [shape = 'f32[2,64,256]{2,1,0:T(8,128)}', space=vmem, size = 0x20000, scoped, tag = 'scratch operand']
  #allocation4 [shape = 'f32[1]{0:T(128)S(6)}', space=smem, size = 0x200, scoped, tag = 'scoped memory for reconstructor_forward.1']
  %s0 = inlined_call_operand.vmem [shape: f32[3,2,5,256], index: 0, kind: input, shape index: {}]
  %s1 = inlined_call_operand.vmem [shape: f32[32,7], index: 1, kind: input, shape index: {}]
  %s2 = inlined_call_operand.vmem [shape: f32[32,64], index: 2, kind: input, shape index: {}]
  %s3 = inlined_call_operand.vmem [shape: f32[1,32], index: 3, kind: input, shape index: {}]
  %s4 = inlined_call_operand.<no memory space> [shape: f32[1], index: 4, kind: input, shape index: {}]
  %s5 = inlined_call_operand.vmem [shape: f32[3,2,1,256], index: 5, kind: output, shape index: {}]
  %s6 = sld [smem:[#allocation0]]
  $region30: #{reconstructor_forward.1} parent=0
    _
  %s8 = ssub.s32 1, %s6
  %s9 = scalar_select 0, %s8, %s6
  %10 = sst [smem:[#allocation4]] %s4
  // Predicated region
  $region2: #{reconstructor_forward.1} parent=0 // pred_check
    _
  $region3: #{reconstructor_forward.1} parent=0 // pred_check_branch
    %12 = sbr.rel (0) target = $region5
  $region4: #{reconstructor_forward.1} parent=0 // pred_region
    _
  $region5: #{reconstructor_forward.1} parent=0 // pred_fallthru
    _
  // Predicated region
  $region6: #{reconstructor_forward.1} parent=0 // pred_check
    _
  $region7: #{reconstructor_forward.1} parent=0 // pred_check_branch
    %14 = sbr.rel (0) target = $region9
  $region8: #{reconstructor_forward.1} parent=0 // pred_region
    _
  $region9: #{reconstructor_forward.1} parent=0 // pred_fallthru
    _
  // Predicated region
  $region10: #{reconstructor_forward.1} parent=0 // pred_check
    _
  $region11: #{reconstructor_forward.1} parent=0 // pred_check_branch
    %16 = sbr.rel (0) target = $region13
  $region12: #{reconstructor_forward.1} parent=0 // pred_region
    _
  $region13: #{reconstructor_forward.1} parent=0 // pred_fallthru
    _
  // Predicated region
  $region14: #{reconstructor_forward.1} parent=0 // pred_check
    _
  $region15: #{reconstructor_forward.1} parent=0 // pred_check_branch
    %18 = sbr.rel (0) target = $region17
  $region16: #{reconstructor_forward.1} parent=0 // pred_region
    _
  $region17: #{reconstructor_forward.1} parent=0 // pred_fallthru
    _
  // Predicated region
  $region18: #{reconstructor_forward.1} parent=0 // pred_check
    _
  $region19: #{reconstructor_forward.1} parent=0 // pred_check_branch
    %20 = sbr.rel (0) target = $region21
  $region20: #{reconstructor_forward.1} parent=0 // pred_region
    _
  $region21: #{reconstructor_forward.1} parent=0 // pred_fallthru
    _
  %21 = vst [vmem:[#allocation2] sm:$0x7f] 0.0
  %22 = vst [vmem:[#allocation2 + $0x8] sm:$0x7f] 0.0
  %23 = vst [vmem:[#allocation2 + $0x10] sm:$0x7f] 0.0
  %24 = vst [vmem:[#allocation2 + $0x18] sm:$0x7f] 0.0
  %v25 = vlaneseq
  %vm26 = vcmp.ge.s32.totalorder %v25, 0
  %vm27 = vcmp.lt.s32.totalorder %v25, 256
  %vm28 = vmand %vm26, %vm27
  %s29 = scalar_lea.vmem [#allocation2], 6
  %30 = vst.msk [vmem:[%s29] ss:$8 sm:$0x3] %vm28, 1.0
  %31 = vst.msk [vmem:[%s29] ss:$8 sm:$0x0] %vm28, 1.0
  %s32 = scalar_lea.vmem [#allocation2], 22
  %33 = vst.msk [vmem:[%s32] ss:$8 sm:$0x3] %vm28, 1.0
  %34 = vst.msk [vmem:[%s32] ss:$8 sm:$0x0] %vm28, 1.0
  %35 = vst [vmem:[#allocation3] sm:$0xff] 0.0
  %36 = vst [vmem:[#allocation3 + $0x8] sm:$0xff] 0.0
  %37 = vst [vmem:[#allocation3 + $0x10] sm:$0xff] 0.0
  %38 = vst [vmem:[#allocation3 + $0x18] sm:$0xff] 0.0
  %39 = vst [vmem:[#allocation3 + $0x20] sm:$0xff] 0.0
  %40 = vst [vmem:[#allocation3 + $0x28] sm:$0xff] 0.0
  %41 = vst [vmem:[#allocation3 + $0x30] sm:$0xff] 0.0
  %42 = vst [vmem:[#allocation3 + $0x38] sm:$0xff] 0.0
  %43 = vst [vmem:[#allocation3 + $0x40] sm:$0xff] 0.0
  %44 = vst [vmem:[#allocation3 + $0x48] sm:$0xff] 0.0
  %45 = vst [vmem:[#allocation3 + $0x50] sm:$0xff] 0.0
  %46 = vst [vmem:[#allocation3 + $0x58] sm:$0xff] 0.0
  %47 = vst [vmem:[#allocation3 + $0x60] sm:$0xff] 0.0
  %48 = vst [vmem:[#allocation3 + $0x68] sm:$0xff] 0.0
  %49 = vst [vmem:[#allocation3 + $0x70] sm:$0xff] 0.0
  %50 = vst [vmem:[#allocation3 + $0x78] sm:$0xff] 0.0
  %51 = vst [vmem:[#allocation3 + $0x80] sm:$0xff] 0.0
  %52 = vst [vmem:[#allocation3 + $0x88] sm:$0xff] 0.0
  %53 = vst [vmem:[#allocation3 + $0x90] sm:$0xff] 0.0
  %54 = vst [vmem:[#allocation3 + $0x98] sm:$0xff] 0.0
  %55 = vst [vmem:[#allocation3 + $0xa0] sm:$0xff] 0.0
  %56 = vst [vmem:[#allocation3 + $0xa8] sm:$0xff] 0.0
  %57 = vst [vmem:[#allocation3 + $0xb0] sm:$0xff] 0.0
  %58 = vst [vmem:[#allocation3 + $0xb8] sm:$0xff] 0.0
  %59 = vst [vmem:[#allocation3 + $0xc0] sm:$0xff] 0.0
  %60 = vst [vmem:[#allocation3 + $0xc8] sm:$0xff] 0.0
  %61 = vst [vmem:[#allocation3 + $0xd0] sm:$0xff] 0.0
  %62 = vst [vmem:[#allocation3 + $0xd8] sm:$0xff] 0.0
  %63 = vst [vmem:[#allocation3 + $0xe0] sm:$0xff] 0.0
  %64 = vst [vmem:[#allocation3 + $0xe8] sm:$0xff] 0.0
  %65 = vst [vmem:[#allocation3 + $0xf0] sm:$0xff] 0.0
  %66 = vst [vmem:[#allocation3 + $0xf8] sm:$0xff] 0.0
  %v67 = vld [vmem:[%s1] sm:$0xff]
  %v68 = vld [vmem:[%s1 + $0x8] sm:$0xff]
  %v69 = vld [vmem:[%s1 + $0x10] sm:$0xff]
  %v70 = vld [vmem:[%s1 + $0x18] sm:$0xff]
  %v71 = vld [vmem:[%s2] sm:$0xff]
  %v72 = vld [vmem:[%s2 + $0x8] sm:$0xff]
  %v73 = vld [vmem:[%s2 + $0x10] sm:$0xff]
  %v74 = vld [vmem:[%s2 + $0x18] sm:$0xff]
  %v75 = vld [vmem:[%s3] sm:$0x1]
  %s76 = sld [smem:[#allocation4]]
  %v77 = vld [vmem:[%s0] sm:$0x1f]
  %v78 = vld [vmem:[%s0 + $0x8] sm:$0x1f]
  %v79 = vld [vmem:[%s0 + $0x10] sm:$0x1f]
  %v80 = vld [vmem:[%s0 + $0x18] sm:$0x1f]
  %81 = vst [vmem:[#allocation2] sm:$0x1f] %v77
  %82 = vst [vmem:[#allocation2 + $0x8] sm:$0x1f] %v78
  %v83 = vld [vmem:[#allocation2] sm:$0x7f]
  %v84 = vld [vmem:[#allocation2 + $0x8] sm:$0x7f]
  %vm85 = vcmask 56320
  %v87 = vsel %vm85, %v67, 0
  %v90 = vsel %vm85, %v68, 0
  %v93 = vsel %vm85, %v69, 0
  %v96 = vsel %vm85, %v70, 0
  %vm98 = vcmask 1046528
  %v100 = vsel %vm98, %v83, 0
  %v103 = vsel %vm98, %v84, 0
  %105 = vmatprep.subr.mxu0 %v103
  %106 = vmatpush1.msra.mxu0 %v100
  %107 = vmatprep.subr.mxu0 0.0
  %108 = vmatpush1.msra.mxu0 0.0
  %109 = vmatprep.subr.mxu0 0.0
  %110 = vmatpush1.msra.mxu0 0.0
  %111 = vmatprep.subr.mxu0 0.0
  %112 = vmatpush1.msra.mxu0 0.0
  %113 = vmatprep.subr.mxu0 0.0
  %114 = vmatpush1.msra.mxu0 0.0
  %115 = vmatprep.subr.mxu0 0.0
  %116 = vmatpush1.msra.mxu0 0.0
  %117 = vmatprep.subr.mxu0 0.0
  %118 = vmatpush1.msra.mxu0 0.0
  %119 = vmatprep.subr.mxu0 0.0
  %120 = vmatpush1.msra.mxu0 0.0
  %121 = vmatprep.subr.mxu0 0.0
  %122 = vmatpush1.msra.mxu0 0.0
  %123 = vmatprep.subr.mxu0 0.0
  %124 = vmatpush1.msra.mxu0 0.0
  %125 = vmatprep.subr.mxu0 0.0
  %126 = vmatpush1.msra.mxu0 0.0
  %127 = vmatprep.subr.mxu0 0.0
  %128 = vmatpush1.msra.mxu0 0.0
  %129 = vmatprep.subr.mxu0 0.0
  %130 = vmatpush1.msra.mxu0 0.0
  %131 = vmatprep.subr.mxu0 0.0
  %132 = vmatpush1.msra.mxu0 0.0
  %133 = vmatprep.subr.mxu0 0.0
  %134 = vmatpush1.msra.mxu0 0.0
  %135 = vmatprep.subr.mxu0 0.0
  %136 = vmatpush1.msra.mxu0 0.0
  %137 = vmatprep.subr.mxu0 0.0
  %138 = vmatpush1.msra.mxu0 0.0
  %139 = vmatprep.subr.mxu0 0.0
  %140 = vmatpush1.msra.mxu0 0.0
  %141 = vmatprep.subr.mxu0 0.0
  %142 = vmatpush1.msra.mxu0 0.0
  %143 = vmatprep.subr.mxu0 0.0
  %144 = vmatpush1.msra.mxu0 0.0
  %145 = vmatprep.subr.mxu0 0.0
  %146 = vmatpush1.msra.mxu0 0.0
  %147 = vmatprep.subr.mxu0 0.0
  %148 = vmatpush1.msra.mxu0 0.0
  %149 = vmatprep.subr.mxu0 0.0
  %150 = vmatpush1.msra.mxu0 0.0
  %151 = vmatprep.subr.mxu0 0.0
  %152 = vmatpush1.msra.mxu0 0.0
  %153 = vmatprep.subr.mxu0 0.0
  %154 = vmatpush1.msra.mxu0 0.0
  %155 = vmatprep.subr.mxu0 0.0
  %156 = vmatpush1.msra.mxu0 0.0
  %157 = vmatprep.subr.mxu0 0.0
  %158 = vmatpush1.msra.mxu0 0.0
  %159 = vmatprep.subr.mxu0 0.0
  %160 = vmatpush1.msra.mxu0 0.0
  %161 = vmatprep.subr.mxu0 0.0
  %162 = vmatpush1.msra.mxu0 0.0
  %163 = vmatprep.subr.mxu0 0.0
  %164 = vmatpush1.msra.mxu0 0.0
  %165 = vmatprep.subr.mxu0 0.0
  %166 = vmatpush1.msra.mxu0 0.0
  %167 = vmatprep.subr.mxu0 0.0
  %168 = vmatpush1.msra.mxu0 0.0
  %169 = vmatprep.mubr.f32.mxu0 0.0
  %170 = vmatmul.mubr.f32.gmra.mrb[0].mxu0 %v87
  %v171 = vpop.f32.mrb[0].mxu0
  %v172 = vadd.f32 0.0, %v171
  %v173 = vpop.f32.mrb[0].mxu0
  %v174 = vadd.f32 0.0, %v173
  %175 = vmatprep.mubr.f32.mxu0 0.0
  %176 = vmatmul.mubr.f32.gmra.mrb[0].mxu0 %v90
  %v177 = vpop.f32.mrb[0].mxu0
  %v178 = vadd.f32 0.0, %v177
  %v179 = vpop.f32.mrb[0].mxu0
  %v180 = vadd.f32 0.0, %v179
  %181 = vmatprep.mubr.f32.mxu0 0.0
  %182 = vmatmul.mubr.f32.gmra.mrb[0].mxu0 %v93
  %v183 = vpop.f32.mrb[0].mxu0
  %v184 = vadd.f32 0.0, %v183
  %v185 = vpop.f32.mrb[0].mxu0
  %v186 = vadd.f32 0.0, %v185
  %187 = vmatprep.mubr.f32.mxu0 0.0
  %188 = vmatmul.mubr.f32.gmra.mrb[0].mxu0 %v96
  %v189 = vpop.f32.mrb[0].mxu0
  %v190 = vadd.f32 0.0, %v189
  %v191 = vpop.f32.mrb[0].mxu0
  %v192 = vadd.f32 0.0, %v191
  %193 = vdwg.mxu0
  %v194 = vmax.f32 %v172, 0.0
  %v195 = vmax.f32 %v174, 0.0
  %v196 = vmax.f32 %v178, 0.0
  %v197 = vmax.f32 %v180, 0.0
  %v198 = vmax.f32 %v184, 0.0
  %v199 = vmax.f32 %v186, 0.0
  %v200 = vmax.f32 %v190, 0.0
  %v201 = vmax.f32 %v192, 0.0
  %202 = vst [vmem:[#allocation3] sm:$0xff] %v194
  %203 = vst [vmem:[#allocation3 + $0x8] sm:$0xff] %v195
  %204 = vst [vmem:[#allocation3 + $0x10] sm:$0xff] %v196
  %205 = vst [vmem:[#allocation3 + $0x18] sm:$0xff] %v197
  %206 = vst [vmem:[#allocation3 + $0x20] sm:$0xff] %v198
  %207 = vst [vmem:[#allocation3 + $0x28] sm:$0xff] %v199
  %208 = vst [vmem:[#allocation3 + $0x30] sm:$0xff] %v200
  %209 = vst [vmem:[#allocation3 + $0x38] sm:$0xff] %v201
  %v210 = vld [vmem:[#allocation3] sm:$0xff]
  %v211 = vld [vmem:[#allocation3 + $0x8] sm:$0xff]
  %v212 = vld [vmem:[#allocation3 + $0x10] sm:$0xff]
  %v213 = vld [vmem:[#allocation3 + $0x18] sm:$0xff]
  %v214 = vld [vmem:[#allocation3 + $0x20] sm:$0xff]
  %v215 = vld [vmem:[#allocation3 + $0x28] sm:$0xff]
  %v216 = vld [vmem:[#allocation3 + $0x30] sm:$0xff]
  %v217 = vld [vmem:[#allocation3 + $0x38] sm:$0xff]
  %v218 = vld [vmem:[#allocation3 + $0x40] sm:$0xff]
  %v219 = vld [vmem:[#allocation3 + $0x48] sm:$0xff]
  %v220 = vld [vmem:[#allocation3 + $0x50] sm:$0xff]
  %v221 = vld [vmem:[#allocation3 + $0x58] sm:$0xff]
  %v222 = vld [vmem:[#allocation3 + $0x60] sm:$0xff]
  %v223 = vld [vmem:[#allocation3 + $0x68] sm:$0xff]
  %v224 = vld [vmem:[#allocation3 + $0x70] sm:$0xff]
  %v225 = vld [vmem:[#allocation3 + $0x78] sm:$0xff]
  %vm226 = vcmask 523264
  %v228 = vsel %vm226, %v71, 0
  %v231 = vsel %vm226, %v72, 0
  %v234 = vsel %vm226, %v73, 0
  %v237 = vsel %vm226, %v74, 0
  %239 = vmatprep.subr.mxu0 %v211
  %240 = vmatpush1.msra.mxu0 %v210
  %241 = vmatprep.subr.mxu0 %v213
  %242 = vmatpush1.msra.mxu0 %v212
  %243 = vmatprep.subr.mxu0 %v215
  %244 = vmatpush1.msra.mxu0 %v214
  %245 = vmatprep.subr.mxu0 %v217
  %246 = vmatpush1.msra.mxu0 %v216
  %247 = vmatprep.subr.mxu0 %v219
  %248 = vmatpush1.msra.mxu0 %v218
  %249 = vmatprep.subr.mxu0 %v221
  %250 = vmatpush1.msra.mxu0 %v220
  %251 = vmatprep.subr.mxu0 %v223
  %252 = vmatpush1.msra.mxu0 %v222
  %253 = vmatprep.subr.mxu0 %v225
  %254 = vmatpush1.msra.mxu0 %v224
  %255 = vmatprep.subr.mxu0 0.0
  %256 = vmatpush1.msra.mxu0 0.0
  %257 = vmatprep.subr.mxu0 0.0
  %258 = vmatpush1.msra.mxu0 0.0
  %259 = vmatprep.subr.mxu0 0.0
  %260 = vmatpush1.msra.mxu0 0.0
  %261 = vmatprep.subr.mxu0 0.0
  %262 = vmatpush1.msra.mxu0 0.0
  %263 = vmatprep.subr.mxu0 0.0
  %264 = vmatpush1.msra.mxu0 0.0
  %265 = vmatprep.subr.mxu0 0.0
  %266 = vmatpush1.msra.mxu0 0.0
  %267 = vmatprep.subr.mxu0 0.0
  %268 = vmatpush1.msra.mxu0 0.0
  %269 = vmatprep.subr.mxu0 0.0
  %270 = vmatpush1.msra.mxu0 0.0
  %271 = vmatprep.subr.mxu0 0.0
  %272 = vmatpush1.msra.mxu0 0.0
  %273 = vmatprep.subr.mxu0 0.0
  %274 = vmatpush1.msra.mxu0 0.0
  %275 = vmatprep.subr.mxu0 0.0
  %276 = vmatpush1.msra.mxu0 0.0
  %277 = vmatprep.subr.mxu0 0.0
  %278 = vmatpush1.msra.mxu0 0.0
  %279 = vmatprep.subr.mxu0 0.0
  %280 = vmatpush1.msra.mxu0 0.0
  %281 = vmatprep.subr.mxu0 0.0
  %282 = vmatpush1.msra.mxu0 0.0
  %283 = vmatprep.subr.mxu0 0.0
  %284 = vmatpush1.msra.mxu0 0.0
  %285 = vmatprep.subr.mxu0 0.0
  %286 = vmatpush1.msra.mxu0 0.0
  %287 = vmatprep.subr.mxu0 0.0
  %288 = vmatpush1.msra.mxu0 0.0
  %289 = vmatprep.subr.mxu0 0.0
  %290 = vmatpush1.msra.mxu0 0.0
  %291 = vmatprep.subr.mxu0 0.0
  %292 = vmatpush1.msra.mxu0 0.0
  %293 = vmatprep.subr.mxu0 0.0
  %294 = vmatpush1.msra.mxu0 0.0
  %295 = vmatprep.subr.mxu0 0.0
  %296 = vmatpush1.msra.mxu0 0.0
  %297 = vmatprep.subr.mxu0 0.0
  %298 = vmatpush1.msra.mxu0 0.0
  %299 = vmatprep.subr.mxu0 0.0
  %300 = vmatpush1.msra.mxu0 0.0
  %301 = vmatprep.subr.mxu0 0.0
  %302 = vmatpush1.msra.mxu0 0.0
  %303 = vmatprep.mubr.f32.mxu0 0.0
  %304 = vmatmul.mubr.f32.gmra.mrb[0].mxu0 %v228
  %v305 = vpop.f32.mrb[0].mxu0
  %v306 = vadd.f32 0.0, %v305
  %v307 = vpop.f32.mrb[0].mxu0
  %v308 = vadd.f32 0.0, %v307
  %309 = vmatprep.mubr.f32.mxu0 0.0
  %310 = vmatmul.mubr.f32.gmra.mrb[0].mxu0 %v231
  %v311 = vpop.f32.mrb[0].mxu0
  %v312 = vadd.f32 0.0, %v311
  %v313 = vpop.f32.mrb[0].mxu0
  %v314 = vadd.f32 0.0, %v313
  %315 = vmatprep.mubr.f32.mxu0 0.0
  %316 = vmatmul.mubr.f32.gmra.mrb[0].mxu0 %v234
  %v317 = vpop.f32.mrb[0].mxu0
  %v318 = vadd.f32 0.0, %v317
  %v319 = vpop.f32.mrb[0].mxu0
  %v320 = vadd.f32 0.0, %v319
  %321 = vmatprep.mubr.f32.mxu0 0.0
  %322 = vmatmul.mubr.f32.gmra.mrb[0].mxu0 %v237
  %v323 = vpop.f32.mrb[0].mxu0
  %v324 = vadd.f32 0.0, %v323
  %v325 = vpop.f32.mrb[0].mxu0
  %v326 = vadd.f32 0.0, %v325
  %327 = vdwg.mxu0
  %v328 = vtanh.pop %v306
  %v329 = vtanh.pop %v308
  %v330 = vtanh.pop %v312
  %v331 = vtanh.pop %v314
  %v332 = vtanh.pop %v318
  %v333 = vtanh.pop %v320
  %v334 = vtanh.pop %v324
  %v335 = vtanh.pop %v326
  %336 = vst [vmem:[#allocation3 + $0x40] sm:$0xff] %v328
  %337 = vst [vmem:[#allocation3 + $0x48] sm:$0xff] %v329
  %338 = vst [vmem:[#allocation3 + $0x50] sm:$0xff] %v330
  %339 = vst [vmem:[#allocation3 + $0x58] sm:$0xff] %v331
  %340 = vst [vmem:[#allocation3 + $0x60] sm:$0xff] %v332
  %341 = vst [vmem:[#allocation3 + $0x68] sm:$0xff] %v333
  %342 = vst [vmem:[#allocation3 + $0x70] sm:$0xff] %v334
  %343 = vst [vmem:[#allocation3 + $0x78] sm:$0xff] %v335
  %v344 = vstv %s76
  %vm345 = vcmask 261120
  %v347 = vsel %vm345, %v75, 0
  %349 = vmatprep.subr.mxu0 %v329
  %350 = vmatpush1.msra.mxu0 %v328
  %351 = vmatprep.subr.mxu0 %v331
  %352 = vmatpush1.msra.mxu0 %v330
  %353 = vmatprep.subr.mxu0 %v333
  %354 = vmatpush1.msra.mxu0 %v332
  %355 = vmatprep.subr.mxu0 %v335
  %356 = vmatpush1.msra.mxu0 %v334
  %357 = vmatprep.subr.mxu0 0.0
  %358 = vmatpush1.msra.mxu0 0.0
  %359 = vmatprep.subr.mxu0 0.0
  %360 = vmatpush1.msra.mxu0 0.0
  %361 = vmatprep.subr.mxu0 0.0
  %362 = vmatpush1.msra.mxu0 0.0
  %363 = vmatprep.subr.mxu0 0.0
  %364 = vmatpush1.msra.mxu0 0.0
  %365 = vmatprep.subr.mxu0 0.0
  %366 = vmatpush1.msra.mxu0 0.0
  %367 = vmatprep.subr.mxu0 0.0
  %368 = vmatpush1.msra.mxu0 0.0
  %369 = vmatprep.subr.mxu0 0.0
  %370 = vmatpush1.msra.mxu0 0.0
  %371 = vmatprep.subr.mxu0 0.0
  %372 = vmatpush1.msra.mxu0 0.0
  %373 = vmatprep.subr.mxu0 0.0
  %374 = vmatpush1.msra.mxu0 0.0
  %375 = vmatprep.subr.mxu0 0.0
  %376 = vmatpush1.msra.mxu0 0.0
  %377 = vmatprep.subr.mxu0 0.0
  %378 = vmatpush1.msra.mxu0 0.0
  %379 = vmatprep.subr.mxu0 0.0
  %380 = vmatpush1.msra.mxu0 0.0
  %381 = vmatprep.subr.mxu0 0.0
  %382 = vmatpush1.msra.mxu0 0.0
  %383 = vmatprep.subr.mxu0 0.0
  %384 = vmatpush1.msra.mxu0 0.0
  %385 = vmatprep.subr.mxu0 0.0
  %386 = vmatpush1.msra.mxu0 0.0
  %387 = vmatprep.subr.mxu0 0.0
  %388 = vmatpush1.msra.mxu0 0.0
  %389 = vmatprep.subr.mxu0 0.0
  %390 = vmatpush1.msra.mxu0 0.0
  %391 = vmatprep.subr.mxu0 0.0
  %392 = vmatpush1.msra.mxu0 0.0
  %393 = vmatprep.subr.mxu0 0.0
  %394 = vmatpush1.msra.mxu0 0.0
  %395 = vmatprep.subr.mxu0 0.0
  %396 = vmatpush1.msra.mxu0 0.0
  %397 = vmatprep.subr.mxu0 0.0
  %398 = vmatpush1.msra.mxu0 0.0
  %399 = vmatprep.subr.mxu0 0.0
  %400 = vmatpush1.msra.mxu0 0.0
  %401 = vmatprep.subr.mxu0 0.0
  %402 = vmatpush1.msra.mxu0 0.0
  %403 = vmatprep.subr.mxu0 0.0
  %404 = vmatpush1.msra.mxu0 0.0
  %405 = vmatprep.subr.mxu0 0.0
  %406 = vmatpush1.msra.mxu0 0.0
  %407 = vmatprep.subr.mxu0 0.0
  %408 = vmatpush1.msra.mxu0 0.0
  %409 = vmatprep.subr.mxu0 0.0
  %410 = vmatpush1.msra.mxu0 0.0
  %411 = vmatprep.subr.mxu0 0.0
  %412 = vmatpush1.msra.mxu0 0.0
  %413 = vmatprep.mubr.f32.mxu0 0.0
  %414 = vmatmul.mubr.f32.gmra.mrb[0].mxu0 %v347
  %v415 = vpop.f32.mrb[0].mxu0
  %v416 = vadd.f32 %v344, %v415
  %v417 = vpop.f32.mrb[0].mxu0
  %v418 = vadd.f32 %v344, %v417
  %419 = vdwg.mxu0
  %v420 = vxor.u32 %v416, 2147483648
  %v421 = vxor.u32 %v418, 2147483648
  %v422 = vmul.f32 %v420, 1.442695
  %v423 = vpow.pop %v422
  %v424 = vmul.f32 %v421, 1.442695
  %v425 = vpow.pop %v424
  %v426 = vadd.f32 %v423, 1.0
  %v427 = vadd.f32 %v425, 1.0
  %v428 = vrcp.pop %v426
  %v429 = vmul.f32 1.0, %v428
  %v430 = vrcp.pop %v427
  %v431 = vmul.f32 1.0, %v430
  %v434 = vcombine.low %v429, %v431
  %v436 = vunpack.c.l.s4 1966171168
  %v437 = vunpack.c.0.s8 %v436
  %v438 = vlaneseq
  %v439 = vshrl.u32 %v438, 7
  %v440 = vsub.s32 %v437, %v439
  %v441 = vrot.slane %v434, %v440
  %v443 = vunpack.c.l.s4 1966171168
  %v444 = vunpack.c.0.s8 %v443
  %v445 = vlaneseq
  %v446 = vshrl.u32 %v445, 7
  %v447 = vsub.s32 %v444, %v446
  %v448 = vrot.slane %v441, %v447
  %450 = vst.msk [vmem:[%s5] sm:$0x3] %vm28, %v448
  %s451 = scalar_lea.vmem [#allocation2], 5
  %452 = vst.msk [vmem:[%s451] ss:$8 sm:$0x3] %vm28, %v448
  %453 = vst.msk [vmem:[%s451] ss:$8 sm:$0x0] %vm28, %v448
  %s454 = scalar_lea.vmem [#allocation2], 16
  %455 = vst [vmem:[%s454] sm:$0x1f] %v79
  %456 = vst [vmem:[%s454 + $0x8] sm:$0x1f] %v80
  %v457 = vld [vmem:[%s454] sm:$0x7f]
  %v458 = vld [vmem:[%s454 + $0x8] sm:$0x7f]
  %v460 = vsel %vm98, %v457, 0
  %v463 = vsel %vm98, %v458, 0
  %465 = vmatprep.subr.mxu0 %v463
  %466 = vmatpush1.msra.mxu0 %v460
  %467 = vmatprep.subr.mxu0 0.0
  %468 = vmatpush1.msra.mxu0 0.0
  %469 = vmatprep.subr.mxu0 0.0
  %470 = vmatpush1.msra.mxu0 0.0
  %471 = vmatprep.subr.mxu0 0.0
  %472 = vmatpush1.msra.mxu0 0.0
  %473 = vmatprep.subr.mxu0 0.0
  %474 = vmatpush1.msra.mxu0 0.0
  %475 = vmatprep.subr.mxu0 0.0
  %476 = vmatpush1.msra.mxu0 0.0
  %477 = vmatprep.subr.mxu0 0.0
  %478 = vmatpush1.msra.mxu0 0.0
  %479 = vmatprep.subr.mxu0 0.0
  %480 = vmatpush1.msra.mxu0 0.0
  %481 = vmatprep.subr.mxu0 0.0
  %482 = vmatpush1.msra.mxu0 0.0
  %483 = vmatprep.subr.mxu0 0.0
  %484 = vmatpush1.msra.mxu0 0.0
  %485 = vmatprep.subr.mxu0 0.0
  %486 = vmatpush1.msra.mxu0 0.0
  %487 = vmatprep.subr.mxu0 0.0
  %488 = vmatpush1.msra.mxu0 0.0
  %489 = vmatprep.subr.mxu0 0.0
  %490 = vmatpush1.msra.mxu0 0.0
  %491 = vmatprep.subr.mxu0 0.0
  %492 = vmatpush1.msra.mxu0 0.0
  %493 = vmatprep.subr.mxu0 0.0
  %494 = vmatpush1.msra.mxu0 0.0
  %495 = vmatprep.subr.mxu0 0.0
  %496 = vmatpush1.msra.mxu0 0.0
  %497 = vmatprep.subr.mxu0 0.0
  %498 = vmatpush1.msra.mxu0 0.0
  %499 = vmatprep.subr.mxu0 0.0
  %500 = vmatpush1.msra.mxu0 0.0
  %501 = vmatprep.subr.mxu0 0.0
  %502 = vmatpush1.msra.mxu0 0.0
  %503 = vmatprep.subr.mxu0 0.0
  %504 = vmatpush1.msra.mxu0 0.0
  %505 = vmatprep.subr.mxu0 0.0
  %506 = vmatpush1.msra.mxu0 0.0
  %507 = vmatprep.subr.mxu0 0.0
  %508 = vmatpush1.msra.mxu0 0.0
  %509 = vmatprep.subr.mxu0 0.0
  %510 = vmatpush1.msra.mxu0 0.0
  %511 = vmatprep.subr.mxu0 0.0
  %512 = vmatpush1.msra.mxu0 0.0
  %513 = vmatprep.subr.mxu0 0.0
  %514 = vmatpush1.msra.mxu0 0.0
  %515 = vmatprep.subr.mxu0 0.0
  %516 = vmatpush1.msra.mxu0 0.0
  %517 = vmatprep.subr.mxu0 0.0
  %518 = vmatpush1.msra.mxu0 0.0
  %519 = vmatprep.subr.mxu0 0.0
  %520 = vmatpush1.msra.mxu0 0.0
  %521 = vmatprep.subr.mxu0 0.0
  %522 = vmatpush1.msra.mxu0 0.0
  %523 = vmatprep.subr.mxu0 0.0
  %524 = vmatpush1.msra.mxu0 0.0
  %525 = vmatprep.subr.mxu0 0.0
  %526 = vmatpush1.msra.mxu0 0.0
  %527 = vmatprep.subr.mxu0 0.0
  %528 = vmatpush1.msra.mxu0 0.0
  %529 = vmatprep.mubr.f32.mxu0 0.0
  %530 = vmatmul.mubr.f32.gmra.mrb[0].mxu0 %v87
  %v531 = vpop.f32.mrb[0].mxu0
  %v532 = vadd.f32 0.0, %v531
  %v533 = vpop.f32.mrb[0].mxu0
  %v534 = vadd.f32 0.0, %v533
  %535 = vmatprep.mubr.f32.mxu0 0.0
  %536 = vmatmul.mubr.f32.gmra.mrb[0].mxu0 %v90
  %v537 = vpop.f32.mrb[0].mxu0
  %v538 = vadd.f32 0.0, %v537
  %v539 = vpop.f32.mrb[0].mxu0
  %v540 = vadd.f32 0.0, %v539
  %541 = vmatprep.mubr.f32.mxu0 0.0
  %542 = vmatmul.mubr.f32.gmra.mrb[0].mxu0 %v93
  %v543 = vpop.f32.mrb[0].mxu0
  %v544 = vadd.f32 0.0, %v543
  %v545 = vpop.f32.mrb[0].mxu0
  %v546 = vadd.f32 0.0, %v545
  %547 = vmatprep.mubr.f32.mxu0 0.0
  %548 = vmatmul.mubr.f32.gmra.mrb[0].mxu0 %v96
  %v549 = vpop.f32.mrb[0].mxu0
  %v550 = vadd.f32 0.0, %v549
  %v551 = vpop.f32.mrb[0].mxu0
  %v552 = vadd.f32 0.0, %v551
  %553 = vdwg.mxu0
  %v554 = vmax.f32 %v532, 0.0
  %v555 = vmax.f32 %v534, 0.0
  %v556 = vmax.f32 %v538, 0.0
  %v557 = vmax.f32 %v540, 0.0
  %v558 = vmax.f32 %v544, 0.0
  %v559 = vmax.f32 %v546, 0.0
  %v560 = vmax.f32 %v550, 0.0
  %v561 = vmax.f32 %v552, 0.0
  %s562 = scalar_lea.vmem [#allocation3], 128
  %563 = vst [vmem:[%s562] sm:$0xff] %v554
  %564 = vst [vmem:[%s562 + $0x8] sm:$0xff] %v555
  %565 = vst [vmem:[%s562 + $0x10] sm:$0xff] %v556
  %566 = vst [vmem:[%s562 + $0x18] sm:$0xff] %v557
  %567 = vst [vmem:[%s562 + $0x20] sm:$0xff] %v558
  %568 = vst [vmem:[%s562 + $0x28] sm:$0xff] %v559
  %569 = vst [vmem:[%s562 + $0x30] sm:$0xff] %v560
  %570 = vst [vmem:[%s562 + $0x38] sm:$0xff] %v561
  %v571 = vld [vmem:[%s562] sm:$0xff]
  %v572 = vld [vmem:[%s562 + $0x8] sm:$0xff]
  %v573 = vld [vmem:[%s562 + $0x10] sm:$0xff]
  %v574 = vld [vmem:[%s562 + $0x18] sm:$0xff]
  %v575 = vld [vmem:[%s562 + $0x20] sm:$0xff]
  %v576 = vld [vmem:[%s562 + $0x28] sm:$0xff]
  %v577 = vld [vmem:[%s562 + $0x30] sm:$0xff]
  %v578 = vld [vmem:[%s562 + $0x38] sm:$0xff]
  %v579 = vld [vmem:[%s562 + $0x40] sm:$0xff]
  %v580 = vld [vmem:[%s562 + $0x48] sm:$0xff]
  %v581 = vld [vmem:[%s562 + $0x50] sm:$0xff]
  %v582 = vld [vmem:[%s562 + $0x58] sm:$0xff]
  %v583 = vld [vmem:[%s562 + $0x60] sm:$0xff]
  %v584 = vld [vmem:[%s562 + $0x68] sm:$0xff]
  %v585 = vld [vmem:[%s562 + $0x70] sm:$0xff]
  %v586 = vld [vmem:[%s562 + $0x78] sm:$0xff]
  %587 = vmatprep.subr.mxu0 %v572
  %588 = vmatpush1.msra.mxu0 %v571
  %589 = vmatprep.subr.mxu0 %v574
  %590 = vmatpush1.msra.mxu0 %v573
  %591 = vmatprep.subr.mxu0 %v576
  %592 = vmatpush1.msra.mxu0 %v575
  %593 = vmatprep.subr.mxu0 %v578
  %594 = vmatpush1.msra.mxu0 %v577
  %595 = vmatprep.subr.mxu0 %v580
  %596 = vmatpush1.msra.mxu0 %v579
  %597 = vmatprep.subr.mxu0 %v582
  %598 = vmatpush1.msra.mxu0 %v581
  %599 = vmatprep.subr.mxu0 %v584
  %600 = vmatpush1.msra.mxu0 %v583
  %601 = vmatprep.subr.mxu0 %v586
  %602 = vmatpush1.msra.mxu0 %v585
  %603 = vmatprep.subr.mxu0 0.0
  %604 = vmatpush1.msra.mxu0 0.0
  %605 = vmatprep.subr.mxu0 0.0
  %606 = vmatpush1.msra.mxu0 0.0
  %607 = vmatprep.subr.mxu0 0.0
  %608 = vmatpush1.msra.mxu0 0.0
  %609 = vmatprep.subr.mxu0 0.0
  %610 = vmatpush1.msra.mxu0 0.0
  %611 = vmatprep.subr.mxu0 0.0
  %612 = vmatpush1.msra.mxu0 0.0
  %613 = vmatprep.subr.mxu0 0.0
  %614 = vmatpush1.msra.mxu0 0.0
  %615 = vmatprep.subr.mxu0 0.0
  %616 = vmatpush1.msra.mxu0 0.0
  %617 = vmatprep.subr.mxu0 0.0
  %618 = vmatpush1.msra.mxu0 0.0
  %619 = vmatprep.subr.mxu0 0.0
  %620 = vmatpush1.msra.mxu0 0.0
  %621 = vmatprep.subr.mxu0 0.0
  %622 = vmatpush1.msra.mxu0 0.0
  %623 = vmatprep.subr.mxu0 0.0
  %624 = vmatpush1.msra.mxu0 0.0
  %625 = vmatprep.subr.mxu0 0.0
  %626 = vmatpush1.msra.mxu0 0.0
  %627 = vmatprep.subr.mxu0 0.0
  %628 = vmatpush1.msra.mxu0 0.0
  %629 = vmatprep.subr.mxu0 0.0
  %630 = vmatpush1.msra.mxu0 0.0
  %631 = vmatprep.subr.mxu0 0.0
  %632 = vmatpush1.msra.mxu0 0.0
  %633 = vmatprep.subr.mxu0 0.0
  %634 = vmatpush1.msra.mxu0 0.0
  %635 = vmatprep.subr.mxu0 0.0
  %636 = vmatpush1.msra.mxu0 0.0
  %637 = vmatprep.subr.mxu0 0.0
  %638 = vmatpush1.msra.mxu0 0.0
  %639 = vmatprep.subr.mxu0 0.0
  %640 = vmatpush1.msra.mxu0 0.0
  %641 = vmatprep.subr.mxu0 0.0
  %642 = vmatpush1.msra.mxu0 0.0
  %643 = vmatprep.subr.mxu0 0.0
  %644 = vmatpush1.msra.mxu0 0.0
  %645 = vmatprep.subr.mxu0 0.0
  %646 = vmatpush1.msra.mxu0 0.0
  %647 = vmatprep.subr.mxu0 0.0
  %648 = vmatpush1.msra.mxu0 0.0
  %649 = vmatprep.subr.mxu0 0.0
  %650 = vmatpush1.msra.mxu0 0.0
  %651 = vmatprep.mubr.f32.mxu0 0.0
  %652 = vmatmul.mubr.f32.gmra.mrb[0].mxu0 %v228
  %v653 = vpop.f32.mrb[0].mxu0
  %v654 = vadd.f32 0.0, %v653
  %v655 = vpop.f32.mrb[0].mxu0
  %v656 = vadd.f32 0.0, %v655
  %657 = vmatprep.mubr.f32.mxu0 0.0
  %658 = vmatmul.mubr.f32.gmra.mrb[0].mxu0 %v231
  %v659 = vpop.f32.mrb[0].mxu0
  %v660 = vadd.f32 0.0, %v659
  %v661 = vpop.f32.mrb[0].mxu0
  %v662 = vadd.f32 0.0, %v661
  %663 = vmatprep.mubr.f32.mxu0 0.0
  %664 = vmatmul.mubr.f32.gmra.mrb[0].mxu0 %v234
  %v665 = vpop.f32.mrb[0].mxu0
  %v666 = vadd.f32 0.0, %v665
  %v667 = vpop.f32.mrb[0].mxu0
  %v668 = vadd.f32 0.0, %v667
  %669 = vmatprep.mubr.f32.mxu0 0.0
  %670 = vmatmul.mubr.f32.gmra.mrb[0].mxu0 %v237
  %v671 = vpop.f32.mrb[0].mxu0
  %v672 = vadd.f32 0.0, %v671
  %v673 = vpop.f32.mrb[0].mxu0
  %v674 = vadd.f32 0.0, %v673
  %675 = vdwg.mxu0
  %v676 = vtanh.pop %v654
  %v677 = vtanh.pop %v656
  %v678 = vtanh.pop %v660
  %v679 = vtanh.pop %v662
  %v680 = vtanh.pop %v666
  %v681 = vtanh.pop %v668
  %v682 = vtanh.pop %v672
  %v683 = vtanh.pop %v674
  %684 = vst [vmem:[%s562 + $0x40] sm:$0xff] %v676
  %685 = vst [vmem:[%s562 + $0x48] sm:$0xff] %v677
  %686 = vst [vmem:[%s562 + $0x50] sm:$0xff] %v678
  %687 = vst [vmem:[%s562 + $0x58] sm:$0xff] %v679
  %688 = vst [vmem:[%s562 + $0x60] sm:$0xff] %v680
  %689 = vst [vmem:[%s562 + $0x68] sm:$0xff] %v681
  %690 = vst [vmem:[%s562 + $0x70] sm:$0xff] %v682
  %691 = vst [vmem:[%s562 + $0x78] sm:$0xff] %v683
  %692 = vmatprep.subr.mxu0 %v677
  %693 = vmatpush1.msra.mxu0 %v676
  %694 = vmatprep.subr.mxu0 %v679
  %695 = vmatpush1.msra.mxu0 %v678
  %696 = vmatprep.subr.mxu0 %v681
  %697 = vmatpush1.msra.mxu0 %v680
  %698 = vmatprep.subr.mxu0 %v683
  %699 = vmatpush1.msra.mxu0 %v682
  %700 = vmatprep.subr.mxu0 0.0
  %701 = vmatpush1.msra.mxu0 0.0
  %702 = vmatprep.subr.mxu0 0.0
  %703 = vmatpush1.msra.mxu0 0.0
  %704 = vmatprep.subr.mxu0 0.0
  %705 = vmatpush1.msra.mxu0 0.0
  %706 = vmatprep.subr.mxu0 0.0
  %707 = vmatpush1.msra.mxu0 0.0
  %708 = vmatprep.subr.mxu0 0.0
  %709 = vmatpush1.msra.mxu0 0.0
  %710 = vmatprep.subr.mxu0 0.0
  %711 = vmatpush1.msra.mxu0 0.0
  %712 = vmatprep.subr.mxu0 0.0
  %713 = vmatpush1.msra.mxu0 0.0
  %714 = vmatprep.subr.mxu0 0.0
  %715 = vmatpush1.msra.mxu0 0.0
  %716 = vmatprep.subr.mxu0 0.0
  %717 = vmatpush1.msra.mxu0 0.0
  %718 = vmatprep.subr.mxu0 0.0
  %719 = vmatpush1.msra.mxu0 0.0
  %720 = vmatprep.subr.mxu0 0.0
  %721 = vmatpush1.msra.mxu0 0.0
  %722 = vmatprep.subr.mxu0 0.0
  %723 = vmatpush1.msra.mxu0 0.0
  %724 = vmatprep.subr.mxu0 0.0
  %725 = vmatpush1.msra.mxu0 0.0
  %726 = vmatprep.subr.mxu0 0.0
  %727 = vmatpush1.msra.mxu0 0.0
  %728 = vmatprep.subr.mxu0 0.0
  %729 = vmatpush1.msra.mxu0 0.0
  %730 = vmatprep.subr.mxu0 0.0
  %731 = vmatpush1.msra.mxu0 0.0
  %732 = vmatprep.subr.mxu0 0.0
  %733 = vmatpush1.msra.mxu0 0.0
  %734 = vmatprep.subr.mxu0 0.0
  %735 = vmatpush1.msra.mxu0 0.0
  %736 = vmatprep.subr.mxu0 0.0
  %737 = vmatpush1.msra.mxu0 0.0
  %738 = vmatprep.subr.mxu0 0.0
  %739 = vmatpush1.msra.mxu0 0.0
  %740 = vmatprep.subr.mxu0 0.0
  %741 = vmatpush1.msra.mxu0 0.0
  %742 = vmatprep.subr.mxu0 0.0
  %743 = vmatpush1.msra.mxu0 0.0
  %744 = vmatprep.subr.mxu0 0.0
  %745 = vmatpush1.msra.mxu0 0.0
  %746 = vmatprep.subr.mxu0 0.0
  %747 = vmatpush1.msra.mxu0 0.0
  %748 = vmatprep.subr.mxu0 0.0
  %749 = vmatpush1.msra.mxu0 0.0
  %750 = vmatprep.subr.mxu0 0.0
  %751 = vmatpush1.msra.mxu0 0.0
  %752 = vmatprep.subr.mxu0 0.0
  %753 = vmatpush1.msra.mxu0 0.0
  %754 = vmatprep.subr.mxu0 0.0
  %755 = vmatpush1.msra.mxu0 0.0
  %756 = vmatprep.mubr.f32.mxu0 0.0
  %757 = vmatmul.mubr.f32.gmra.mrb[0].mxu0 %v347
  %v758 = vpop.f32.mrb[0].mxu0
  %v759 = vadd.f32 %v344, %v758
  %v760 = vpop.f32.mrb[0].mxu0
  %v761 = vadd.f32 %v344, %v760
  %762 = vdwg.mxu0
  %v763 = vxor.u32 %v759, 2147483648
  %v764 = vxor.u32 %v761, 2147483648
  %v765 = vmul.f32 %v763, 1.442695
  %v766 = vpow.pop %v765
  %v767 = vmul.f32 %v764, 1.442695
  %v768 = vpow.pop %v767
  %v769 = vadd.f32 %v766, 1.0
  %v770 = vadd.f32 %v768, 1.0
  %v771 = vrcp.pop %v769
  %v772 = vmul.f32 1.0, %v771
  %v773 = vrcp.pop %v770
  %v774 = vmul.f32 1.0, %v773
  %v777 = vcombine.low %v772, %v774
  %v779 = vunpack.c.l.s4 1966171168
  %v780 = vunpack.c.0.s8 %v779
  %v781 = vlaneseq
  %v782 = vshrl.u32 %v781, 7
  %v783 = vsub.s32 %v780, %v782
  %v784 = vrot.slane %v777, %v783
  %v786 = vunpack.c.l.s4 1966171168
  %v787 = vunpack.c.0.s8 %v786
  %v788 = vlaneseq
  %v789 = vshrl.u32 %v788, 7
  %v790 = vsub.s32 %v787, %v789
  %v791 = vrot.slane %v784, %v790
  %s793 = scalar_lea.vmem %s5, 2
  %794 = vst.msk [vmem:[%s793] sm:$0x3] %vm28, %v791
  %s795 = scalar_lea.vmem %s454, 5 [#allocation2]
  %796 = vst.msk [vmem:[%s795] ss:$8 sm:$0x3] %vm28, %v791
  %797 = vst.msk [vmem:[%s795] ss:$8 sm:$0x0] %vm28, %v791
  %s798 = scalar_lea.vmem %s0, 32
  %v799 = vld [vmem:[%s798] sm:$0x1f]
  %v800 = vld [vmem:[%s798 + $0x8] sm:$0x1f]
  %v801 = vld [vmem:[%s798 + $0x10] sm:$0x1f]
  %v802 = vld [vmem:[%s798 + $0x18] sm:$0x1f]
  %803 = vst [vmem:[#allocation2] sm:$0x1f] %v799
  %804 = vst [vmem:[#allocation2 + $0x8] sm:$0x1f] %v800
  %v805 = vld [vmem:[#allocation2] sm:$0x7f]
  %v806 = vld [vmem:[#allocation2 + $0x8] sm:$0x7f]
  %v808 = vsel %vm98, %v805, 0
  %v811 = vsel %vm98, %v806, 0
  %813 = vmatprep.subr.mxu0 %v811
  %814 = vmatpush1.msra.mxu0 %v808
  %815 = vmatprep.subr.mxu0 0.0
  %816 = vmatpush1.msra.mxu0 0.0
  %817 = vmatprep.subr.mxu0 0.0
  %818 = vmatpush1.msra.mxu0 0.0
  %819 = vmatprep.subr.mxu0 0.0
  %820 = vmatpush1.msra.mxu0 0.0
  %821 = vmatprep.subr.mxu0 0.0
  %822 = vmatpush1.msra.mxu0 0.0
  %823 = vmatprep.subr.mxu0 0.0
  %824 = vmatpush1.msra.mxu0 0.0
  %825 = vmatprep.subr.mxu0 0.0
  %826 = vmatpush1.msra.mxu0 0.0
  %827 = vmatprep.subr.mxu0 0.0
  %828 = vmatpush1.msra.mxu0 0.0
  %829 = vmatprep.subr.mxu0 0.0
  %830 = vmatpush1.msra.mxu0 0.0
  %831 = vmatprep.subr.mxu0 0.0
  %832 = vmatpush1.msra.mxu0 0.0
  %833 = vmatprep.subr.mxu0 0.0
  %834 = vmatpush1.msra.mxu0 0.0
  %835 = vmatprep.subr.mxu0 0.0
  %836 = vmatpush1.msra.mxu0 0.0
  %837 = vmatprep.subr.mxu0 0.0
  %838 = vmatpush1.msra.mxu0 0.0
  %839 = vmatprep.subr.mxu0 0.0
  %840 = vmatpush1.msra.mxu0 0.0
  %841 = vmatprep.subr.mxu0 0.0
  %842 = vmatpush1.msra.mxu0 0.0
  %843 = vmatprep.subr.mxu0 0.0
  %844 = vmatpush1.msra.mxu0 0.0
  %845 = vmatprep.subr.mxu0 0.0
  %846 = vmatpush1.msra.mxu0 0.0
  %847 = vmatprep.subr.mxu0 0.0
  %848 = vmatpush1.msra.mxu0 0.0
  %849 = vmatprep.subr.mxu0 0.0
  %850 = vmatpush1.msra.mxu0 0.0
  %851 = vmatprep.subr.mxu0 0.0
  %852 = vmatpush1.msra.mxu0 0.0
  %853 = vmatprep.subr.mxu0 0.0
  %854 = vmatpush1.msra.mxu0 0.0
  %855 = vmatprep.subr.mxu0 0.0
  %856 = vmatpush1.msra.mxu0 0.0
  %857 = vmatprep.subr.mxu0 0.0
  %858 = vmatpush1.msra.mxu0 0.0
  %859 = vmatprep.subr.mxu0 0.0
  %860 = vmatpush1.msra.mxu0 0.0
  %861 = vmatprep.subr.mxu0 0.0
  %862 = vmatpush1.msra.mxu0 0.0
  %863 = vmatprep.subr.mxu0 0.0
  %864 = vmatpush1.msra.mxu0 0.0
  %865 = vmatprep.subr.mxu0 0.0
  %866 = vmatpush1.msra.mxu0 0.0
  %867 = vmatprep.subr.mxu0 0.0
  %868 = vmatpush1.msra.mxu0 0.0
  %869 = vmatprep.subr.mxu0 0.0
  %870 = vmatpush1.msra.mxu0 0.0
  %871 = vmatprep.subr.mxu0 0.0
  %872 = vmatpush1.msra.mxu0 0.0
  %873 = vmatprep.subr.mxu0 0.0
  %874 = vmatpush1.msra.mxu0 0.0
  %875 = vmatprep.subr.mxu0 0.0
  %876 = vmatpush1.msra.mxu0 0.0
  %877 = vmatprep.mubr.f32.mxu0 0.0
  %878 = vmatmul.mubr.f32.gmra.mrb[0].mxu0 %v87
  %v879 = vpop.f32.mrb[0].mxu0
  %v880 = vadd.f32 0.0, %v879
  %v881 = vpop.f32.mrb[0].mxu0
  %v882 = vadd.f32 0.0, %v881
  %883 = vmatprep.mubr.f32.mxu0 0.0
  %884 = vmatmul.mubr.f32.gmra.mrb[0].mxu0 %v90
  %v885 = vpop.f32.mrb[0].mxu0
  %v886 = vadd.f32 0.0, %v885
  %v887 = vpop.f32.mrb[0].mxu0
  %v888 = vadd.f32 0.0, %v887
  %889 = vmatprep.mubr.f32.mxu0 0.0
  %890 = vmatmul.mubr.f32.gmra.mrb[0].mxu0 %v93
  %v891 = vpop.f32.mrb[0].mxu0
  %v892 = vadd.f32 0.0, %v891
  %v893 = vpop.f32.mrb[0].mxu0
  %v894 = vadd.f32 0.0, %v893
  %895 = vmatprep.mubr.f32.mxu0 0.0
  %896 = vmatmul.mubr.f32.gmra.mrb[0].mxu0 %v96
  %v897 = vpop.f32.mrb[0].mxu0
  %v898 = vadd.f32 0.0, %v897
  %v899 = vpop.f32.mrb[0].mxu0
  %v900 = vadd.f32 0.0, %v899
  %901 = vdwg.mxu0
  %v902 = vmax.f32 %v880, 0.0
  %v903 = vmax.f32 %v882, 0.0
  %v904 = vmax.f32 %v886, 0.0
  %v905 = vmax.f32 %v888, 0.0
  %v906 = vmax.f32 %v892, 0.0
  %v907 = vmax.f32 %v894, 0.0
  %v908 = vmax.f32 %v898, 0.0
  %v909 = vmax.f32 %v900, 0.0
  %910 = vst [vmem:[#allocation3] sm:$0xff] %v902
  %911 = vst [vmem:[#allocation3 + $0x8] sm:$0xff] %v903
  %912 = vst [vmem:[#allocation3 + $0x10] sm:$0xff] %v904
  %913 = vst [vmem:[#allocation3 + $0x18] sm:$0xff] %v905
  %914 = vst [vmem:[#allocation3 + $0x20] sm:$0xff] %v906
  %915 = vst [vmem:[#allocation3 + $0x28] sm:$0xff] %v907
  %916 = vst [vmem:[#allocation3 + $0x30] sm:$0xff] %v908
  %917 = vst [vmem:[#allocation3 + $0x38] sm:$0xff] %v909
  %v918 = vld [vmem:[#allocation3] sm:$0xff]
  %v919 = vld [vmem:[#allocation3 + $0x8] sm:$0xff]
  %v920 = vld [vmem:[#allocation3 + $0x10] sm:$0xff]
  %v921 = vld [vmem:[#allocation3 + $0x18] sm:$0xff]
  %v922 = vld [vmem:[#allocation3 + $0x20] sm:$0xff]
  %v923 = vld [vmem:[#allocation3 + $0x28] sm:$0xff]
  %v924 = vld [vmem:[#allocation3 + $0x30] sm:$0xff]
  %v925 = vld [vmem:[#allocation3 + $0x38] sm:$0xff]
  %v926 = vld [vmem:[#allocation3 + $0x40] sm:$0xff]
  %v927 = vld [vmem:[#allocation3 + $0x48] sm:$0xff]
  %v928 = vld [vmem:[#allocation3 + $0x50] sm:$0xff]
  %v929 = vld [vmem:[#allocation3 + $0x58] sm:$0xff]
  %v930 = vld [vmem:[#allocation3 + $0x60] sm:$0xff]
  %v931 = vld [vmem:[#allocation3 + $0x68] sm:$0xff]
  %v932 = vld [vmem:[#allocation3 + $0x70] sm:$0xff]
  %v933 = vld [vmem:[#allocation3 + $0x78] sm:$0xff]
  %934 = vmatprep.subr.mxu0 %v919
  %935 = vmatpush1.msra.mxu0 %v918
  %936 = vmatprep.subr.mxu0 %v921
  %937 = vmatpush1.msra.mxu0 %v920
  %938 = vmatprep.subr.mxu0 %v923
  %939 = vmatpush1.msra.mxu0 %v922
  %940 = vmatprep.subr.mxu0 %v925
  %941 = vmatpush1.msra.mxu0 %v924
  %942 = vmatprep.subr.mxu0 %v927
  %943 = vmatpush1.msra.mxu0 %v926
  %944 = vmatprep.subr.mxu0 %v929
  %945 = vmatpush1.msra.mxu0 %v928
  %946 = vmatprep.subr.mxu0 %v931
  %947 = vmatpush1.msra.mxu0 %v930
  %948 = vmatprep.subr.mxu0 %v933
  %949 = vmatpush1.msra.mxu0 %v932
  %950 = vmatprep.subr.mxu0 0.0
  %951 = vmatpush1.msra.mxu0 0.0
  %952 = vmatprep.subr.mxu0 0.0
  %953 = vmatpush1.msra.mxu0 0.0
  %954 = vmatprep.subr.mxu0 0.0
  %955 = vmatpush1.msra.mxu0 0.0
  %956 = vmatprep.subr.mxu0 0.0
  %957 = vmatpush1.msra.mxu0 0.0
  %958 = vmatprep.subr.mxu0 0.0
  %959 = vmatpush1.msra.mxu0 0.0
  %960 = vmatprep.subr.mxu0 0.0
  %961 = vmatpush1.msra.mxu0 0.0
  %962 = vmatprep.subr.mxu0 0.0
  %963 = vmatpush1.msra.mxu0 0.0
  %964 = vmatprep.subr.mxu0 0.0
  %965 = vmatpush1.msra.mxu0 0.0
  %966 = vmatprep.subr.mxu0 0.0
  %967 = vmatpush1.msra.mxu0 0.0
  %968 = vmatprep.subr.mxu0 0.0
  %969 = vmatpush1.msra.mxu0 0.0
  %970 = vmatprep.subr.mxu0 0.0
  %971 = vmatpush1.msra.mxu0 0.0
  %972 = vmatprep.subr.mxu0 0.0
  %973 = vmatpush1.msra.mxu0 0.0
  %974 = vmatprep.subr.mxu0 0.0
  %975 = vmatpush1.msra.mxu0 0.0
  %976 = vmatprep.subr.mxu0 0.0
  %977 = vmatpush1.msra.mxu0 0.0
  %978 = vmatprep.subr.mxu0 0.0
  %979 = vmatpush1.msra.mxu0 0.0
  %980 = vmatprep.subr.mxu0 0.0
  %981 = vmatpush1.msra.mxu0 0.0
  %982 = vmatprep.subr.mxu0 0.0
  %983 = vmatpush1.msra.mxu0 0.0
  %984 = vmatprep.subr.mxu0 0.0
  %985 = vmatpush1.msra.mxu0 0.0
  %986 = vmatprep.subr.mxu0 0.0
  %987 = vmatpush1.msra.mxu0 0.0
  %988 = vmatprep.subr.mxu0 0.0
  %989 = vmatpush1.msra.mxu0 0.0
  %990 = vmatprep.subr.mxu0 0.0
  %991 = vmatpush1.msra.mxu0 0.0
  %992 = vmatprep.subr.mxu0 0.0
  %993 = vmatpush1.msra.mxu0 0.0
  %994 = vmatprep.subr.mxu0 0.0
  %995 = vmatpush1.msra.mxu0 0.0
  %996 = vmatprep.subr.mxu0 0.0
  %997 = vmatpush1.msra.mxu0 0.0
  %998 = vmatprep.mubr.f32.mxu0 0.0
  %999 = vmatmul.mubr.f32.gmra.mrb[0].mxu0 %v228
  %v1000 = vpop.f32.mrb[0].mxu0
  %v1001 = vadd.f32 0.0, %v1000
  %v1002 = vpop.f32.mrb[0].mxu0
  %v1003 = vadd.f32 0.0, %v1002
  %1004 = vmatprep.mubr.f32.mxu0 0.0
  %1005 = vmatmul.mubr.f32.gmra.mrb[0].mxu0 %v231
  %v1006 = vpop.f32.mrb[0].mxu0
  %v1007 = vadd.f32 0.0, %v1006
  %v1008 = vpop.f32.mrb[0].mxu0
  %v1009 = vadd.f32 0.0, %v1008
  %1010 = vmatprep.mubr.f32.mxu0 0.0
  %1011 = vmatmul.mubr.f32.gmra.mrb[0].mxu0 %v234
  %v1012 = vpop.f32.mrb[0].mxu0
  %v1013 = vadd.f32 0.0, %v1012
  %v1014 = vpop.f32.mrb[0].mxu0
  %v1015 = vadd.f32 0.0, %v1014
  %1016 = vmatprep.mubr.f32.mxu0 0.0
  %1017 = vmatmul.mubr.f32.gmra.mrb[0].mxu0 %v237
  %v1018 = vpop.f32.mrb[0].mxu0
  %v1019 = vadd.f32 0.0, %v1018
  %v1020 = vpop.f32.mrb[0].mxu0
  %v1021 = vadd.f32 0.0, %v1020
  %1022 = vdwg.mxu0
  %v1023 = vtanh.pop %v1001
  %v1024 = vtanh.pop %v1003
  %v1025 = vtanh.pop %v1007
  %v1026 = vtanh.pop %v1009
  %v1027 = vtanh.pop %v1013
  %v1028 = vtanh.pop %v1015
  %v1029 = vtanh.pop %v1019
  %v1030 = vtanh.pop %v1021
  %1031 = vst [vmem:[#allocation3 + $0x40] sm:$0xff] %v1023
  %1032 = vst [vmem:[#allocation3 + $0x48] sm:$0xff] %v1024
  %1033 = vst [vmem:[#allocation3 + $0x50] sm:$0xff] %v1025
  %1034 = vst [vmem:[#allocation3 + $0x58] sm:$0xff] %v1026
  %1035 = vst [vmem:[#allocation3 + $0x60] sm:$0xff] %v1027
  %1036 = vst [vmem:[#allocation3 + $0x68] sm:$0xff] %v1028
  %1037 = vst [vmem:[#allocation3 + $0x70] sm:$0xff] %v1029
  %1038 = vst [vmem:[#allocation3 + $0x78] sm:$0xff] %v1030
  %1039 = vmatprep.subr.mxu0 %v1024
  %1040 = vmatpush1.msra.mxu0 %v1023
  %1041 = vmatprep.subr.mxu0 %v1026
  %1042 = vmatpush1.msra.mxu0 %v1025
  %1043 = vmatprep.subr.mxu0 %v1028
  %1044 = vmatpush1.msra.mxu0 %v1027
  %1045 = vmatprep.subr.mxu0 %v1030
  %1046 = vmatpush1.msra.mxu0 %v1029
  %1047 = vmatprep.subr.mxu0 0.0
  %1048 = vmatpush1.msra.mxu0 0.0
  %1049 = vmatprep.subr.mxu0 0.0
  %1050 = vmatpush1.msra.mxu0 0.0
  %1051 = vmatprep.subr.mxu0 0.0
  %1052 = vmatpush1.msra.mxu0 0.0
  %1053 = vmatprep.subr.mxu0 0.0
  %1054 = vmatpush1.msra.mxu0 0.0
  %1055 = vmatprep.subr.mxu0 0.0
  %1056 = vmatpush1.msra.mxu0 0.0
  %1057 = vmatprep.subr.mxu0 0.0
  %1058 = vmatpush1.msra.mxu0 0.0
  %1059 = vmatprep.subr.mxu0 0.0
  %1060 = vmatpush1.msra.mxu0 0.0
  %1061 = vmatprep.subr.mxu0 0.0
  %1062 = vmatpush1.msra.mxu0 0.0
  %1063 = vmatprep.subr.mxu0 0.0
  %1064 = vmatpush1.msra.mxu0 0.0
  %1065 = vmatprep.subr.mxu0 0.0
  %1066 = vmatpush1.msra.mxu0 0.0
  %1067 = vmatprep.subr.mxu0 0.0
  %1068 = vmatpush1.msra.mxu0 0.0
  %1069 = vmatprep.subr.mxu0 0.0
  %1070 = vmatpush1.msra.mxu0 0.0
  %1071 = vmatprep.subr.mxu0 0.0
  %1072 = vmatpush1.msra.mxu0 0.0
  %1073 = vmatprep.subr.mxu0 0.0
  %1074 = vmatpush1.msra.mxu0 0.0
  %1075 = vmatprep.subr.mxu0 0.0
  %1076 = vmatpush1.msra.mxu0 0.0
  %1077 = vmatprep.subr.mxu0 0.0
  %1078 = vmatpush1.msra.mxu0 0.0
  %1079 = vmatprep.subr.mxu0 0.0
  %1080 = vmatpush1.msra.mxu0 0.0
  %1081 = vmatprep.subr.mxu0 0.0
  %1082 = vmatpush1.msra.mxu0 0.0
  %1083 = vmatprep.subr.mxu0 0.0
  %1084 = vmatpush1.msra.mxu0 0.0
  %1085 = vmatprep.subr.mxu0 0.0
  %1086 = vmatpush1.msra.mxu0 0.0
  %1087 = vmatprep.subr.mxu0 0.0
  %1088 = vmatpush1.msra.mxu0 0.0
  %1089 = vmatprep.subr.mxu0 0.0
  %1090 = vmatpush1.msra.mxu0 0.0
  %1091 = vmatprep.subr.mxu0 0.0
  %1092 = vmatpush1.msra.mxu0 0.0
  %1093 = vmatprep.subr.mxu0 0.0
  %1094 = vmatpush1.msra.mxu0 0.0
  %1095 = vmatprep.subr.mxu0 0.0
  %1096 = vmatpush1.msra.mxu0 0.0
  %1097 = vmatprep.subr.mxu0 0.0
  %1098 = vmatpush1.msra.mxu0 0.0
  %1099 = vmatprep.subr.mxu0 0.0
  %1100 = vmatpush1.msra.mxu0 0.0
  %1101 = vmatprep.subr.mxu0 0.0
  %1102 = vmatpush1.msra.mxu0 0.0
  %1103 = vmatprep.mubr.f32.mxu0 0.0
  %1104 = vmatmul.mubr.f32.gmra.mrb[0].mxu0 %v347
  %v1105 = vpop.f32.mrb[0].mxu0
  %v1106 = vadd.f32 %v344, %v1105
  %v1107 = vpop.f32.mrb[0].mxu0
  %v1108 = vadd.f32 %v344, %v1107
  %1109 = vdwg.mxu0
  %v1110 = vxor.u32 %v1106, 2147483648
  %v1111 = vxor.u32 %v1108, 2147483648
  %v1112 = vmul.f32 %v1110, 1.442695
  %v1113 = vpow.pop %v1112
  %v1114 = vmul.f32 %v1111, 1.442695
  %v1115 = vpow.pop %v1114
  %v1116 = vadd.f32 %v1113, 1.0
  %v1117 = vadd.f32 %v1115, 1.0
  %v1118 = vrcp.pop %v1116
  %v1119 = vmul.f32 1.0, %v1118
  %v1120 = vrcp.pop %v1117
  %v1121 = vmul.f32 1.0, %v1120
  %v1124 = vcombine.low %v1119, %v1121
  %v1126 = vunpack.c.l.s4 1966171168
  %v1127 = vunpack.c.0.s8 %v1126
  %v1128 = vlaneseq
  %v1129 = vshrl.u32 %v1128, 7
  %v1130 = vsub.s32 %v1127, %v1129
  %v1131 = vrot.slane %v1124, %v1130
  %v1133 = vunpack.c.l.s4 1966171168
  %v1134 = vunpack.c.0.s8 %v1133
  %v1135 = vlaneseq
  %v1136 = vshrl.u32 %v1135, 7
  %v1137 = vsub.s32 %v1134, %v1136
  %v1138 = vrot.slane %v1131, %v1137
  %s1140 = scalar_lea.vmem %s5, 4
  %1141 = vst.msk [vmem:[%s1140] sm:$0x3] %vm28, %v1138
  %1142 = vst.msk [vmem:[%s451] ss:$8 sm:$0x3] %vm28, %v1138
  %1143 = vst.msk [vmem:[%s451] ss:$8 sm:$0x0] %vm28, %v1138
  %1144 = vst [vmem:[%s454] sm:$0x1f] %v801
  %1145 = vst [vmem:[%s454 + $0x8] sm:$0x1f] %v802
  %v1146 = vld [vmem:[%s454] sm:$0x7f]
  %v1147 = vld [vmem:[%s454 + $0x8] sm:$0x7f]
  %v1149 = vsel %vm98, %v1146, 0
  %v1152 = vsel %vm98, %v1147, 0
  %1154 = vmatprep.subr.mxu0 %v1152
  %1155 = vmatpush1.msra.mxu0 %v1149
  %1156 = vmatprep.subr.mxu0 0.0
  %1157 = vmatpush1.msra.mxu0 0.0
  %1158 = vmatprep.subr.mxu0 0.0
  %1159 = vmatpush1.msra.mxu0 0.0
  %1160 = vmatprep.subr.mxu0 0.0
  %1161 = vmatpush1.msra.mxu0 0.0
  %1162 = vmatprep.subr.mxu0 0.0
  %1163 = vmatpush1.msra.mxu0 0.0
  %1164 = vmatprep.subr.mxu0 0.0
  %1165 = vmatpush1.msra.mxu0 0.0
  %1166 = vmatprep.subr.mxu0 0.0
  %1167 = vmatpush1.msra.mxu0 0.0
  %1168 = vmatprep.subr.mxu0 0.0
  %1169 = vmatpush1.msra.mxu0 0.0
  %1170 = vmatprep.subr.mxu0 0.0
  %1171 = vmatpush1.msra.mxu0 0.0
  %1172 = vmatprep.subr.mxu0 0.0
  %1173 = vmatpush1.msra.mxu0 0.0
  %1174 = vmatprep.subr.mxu0 0.0
  %1175 = vmatpush1.msra.mxu0 0.0
  %1176 = vmatprep.subr.mxu0 0.0
  %1177 = vmatpush1.msra.mxu0 0.0
  %1178 = vmatprep.subr.mxu0 0.0
  %1179 = vmatpush1.msra.mxu0 0.0
  %1180 = vmatprep.subr.mxu0 0.0
  %1181 = vmatpush1.msra.mxu0 0.0
  %1182 = vmatprep.subr.mxu0 0.0
  %1183 = vmatpush1.msra.mxu0 0.0
  %1184 = vmatprep.subr.mxu0 0.0
  %1185 = vmatpush1.msra.mxu0 0.0
  %1186 = vmatprep.subr.mxu0 0.0
  %1187 = vmatpush1.msra.mxu0 0.0
  %1188 = vmatprep.subr.mxu0 0.0
  %1189 = vmatpush1.msra.mxu0 0.0
  %1190 = vmatprep.subr.mxu0 0.0
  %1191 = vmatpush1.msra.mxu0 0.0
  %1192 = vmatprep.subr.mxu0 0.0
  %1193 = vmatpush1.msra.mxu0 0.0
  %1194 = vmatprep.subr.mxu0 0.0
  %1195 = vmatpush1.msra.mxu0 0.0
  %1196 = vmatprep.subr.mxu0 0.0
  %1197 = vmatpush1.msra.mxu0 0.0
  %1198 = vmatprep.subr.mxu0 0.0
  %1199 = vmatpush1.msra.mxu0 0.0
  %1200 = vmatprep.subr.mxu0 0.0
  %1201 = vmatpush1.msra.mxu0 0.0
  %1202 = vmatprep.subr.mxu0 0.0
  %1203 = vmatpush1.msra.mxu0 0.0
  %1204 = vmatprep.subr.mxu0 0.0
  %1205 = vmatpush1.msra.mxu0 0.0
  %1206 = vmatprep.subr.mxu0 0.0
  %1207 = vmatpush1.msra.mxu0 0.0
  %1208 = vmatprep.subr.mxu0 0.0
  %1209 = vmatpush1.msra.mxu0 0.0
  %1210 = vmatprep.subr.mxu0 0.0
  %1211 = vmatpush1.msra.mxu0 0.0
  %1212 = vmatprep.subr.mxu0 0.0
  %1213 = vmatpush1.msra.mxu0 0.0
  %1214 = vmatprep.subr.mxu0 0.0
  %1215 = vmatpush1.msra.mxu0 0.0
  %1216 = vmatprep.subr.mxu0 0.0
  %1217 = vmatpush1.msra.mxu0 0.0
  %1218 = vmatprep.mubr.f32.mxu0 0.0
  %1219 = vmatmul.mubr.f32.gmra.mrb[0].mxu0 %v87
  %v1220 = vpop.f32.mrb[0].mxu0
  %v1221 = vadd.f32 0.0, %v1220
  %v1222 = vpop.f32.mrb[0].mxu0
  %v1223 = vadd.f32 0.0, %v1222
  %1224 = vmatprep.mubr.f32.mxu0 0.0
  %1225 = vmatmul.mubr.f32.gmra.mrb[0].mxu0 %v90
  %v1226 = vpop.f32.mrb[0].mxu0
  %v1227 = vadd.f32 0.0, %v1226
  %v1228 = vpop.f32.mrb[0].mxu0
  %v1229 = vadd.f32 0.0, %v1228
  %1230 = vmatprep.mubr.f32.mxu0 0.0
  %1231 = vmatmul.mubr.f32.gmra.mrb[0].mxu0 %v93
  %v1232 = vpop.f32.mrb[0].mxu0
  %v1233 = vadd.f32 0.0, %v1232
  %v1234 = vpop.f32.mrb[0].mxu0
  %v1235 = vadd.f32 0.0, %v1234
  %1236 = vmatprep.mubr.f32.mxu0 0.0
  %1237 = vmatmul.mubr.f32.gmra.mrb[0].mxu0 %v96
  %v1238 = vpop.f32.mrb[0].mxu0
  %v1239 = vadd.f32 0.0, %v1238
  %v1240 = vpop.f32.mrb[0].mxu0
  %v1241 = vadd.f32 0.0, %v1240
  %1242 = vdwg.mxu0
  %v1243 = vmax.f32 %v1221, 0.0
  %v1244 = vmax.f32 %v1223, 0.0
  %v1245 = vmax.f32 %v1227, 0.0
  %v1246 = vmax.f32 %v1229, 0.0
  %v1247 = vmax.f32 %v1233, 0.0
  %v1248 = vmax.f32 %v1235, 0.0
  %v1249 = vmax.f32 %v1239, 0.0
  %v1250 = vmax.f32 %v1241, 0.0
  %1251 = vst [vmem:[%s562] sm:$0xff] %v1243
  %1252 = vst [vmem:[%s562 + $0x8] sm:$0xff] %v1244
  %1253 = vst [vmem:[%s562 + $0x10] sm:$0xff] %v1245
  %1254 = vst [vmem:[%s562 + $0x18] sm:$0xff] %v1246
  %1255 = vst [vmem:[%s562 + $0x20] sm:$0xff] %v1247
  %1256 = vst [vmem:[%s562 + $0x28] sm:$0xff] %v1248
  %1257 = vst [vmem:[%s562 + $0x30] sm:$0xff] %v1249
  %1258 = vst [vmem:[%s562 + $0x38] sm:$0xff] %v1250
  %v1259 = vld [vmem:[%s562] sm:$0xff]
  %v1260 = vld [vmem:[%s562 + $0x8] sm:$0xff]
  %v1261 = vld [vmem:[%s562 + $0x10] sm:$0xff]
  %v1262 = vld [vmem:[%s562 + $0x18] sm:$0xff]
  %v1263 = vld [vmem:[%s562 + $0x20] sm:$0xff]
  %v1264 = vld [vmem:[%s562 + $0x28] sm:$0xff]
  %v1265 = vld [vmem:[%s562 + $0x30] sm:$0xff]
  %v1266 = vld [vmem:[%s562 + $0x38] sm:$0xff]
  %v1267 = vld [vmem:[%s562 + $0x40] sm:$0xff]
  %v1268 = vld [vmem:[%s562 + $0x48] sm:$0xff]
  %v1269 = vld [vmem:[%s562 + $0x50] sm:$0xff]
  %v1270 = vld [vmem:[%s562 + $0x58] sm:$0xff]
  %v1271 = vld [vmem:[%s562 + $0x60] sm:$0xff]
  %v1272 = vld [vmem:[%s562 + $0x68] sm:$0xff]
  %v1273 = vld [vmem:[%s562 + $0x70] sm:$0xff]
  %v1274 = vld [vmem:[%s562 + $0x78] sm:$0xff]
  %1275 = vmatprep.subr.mxu0 %v1260
  %1276 = vmatpush1.msra.mxu0 %v1259
  %1277 = vmatprep.subr.mxu0 %v1262
  %1278 = vmatpush1.msra.mxu0 %v1261
  %1279 = vmatprep.subr.mxu0 %v1264
  %1280 = vmatpush1.msra.mxu0 %v1263
  %1281 = vmatprep.subr.mxu0 %v1266
  %1282 = vmatpush1.msra.mxu0 %v1265
  %1283 = vmatprep.subr.mxu0 %v1268
  %1284 = vmatpush1.msra.mxu0 %v1267
  %1285 = vmatprep.subr.mxu0 %v1270
  %1286 = vmatpush1.msra.mxu0 %v1269
  %1287 = vmatprep.subr.mxu0 %v1272
  %1288 = vmatpush1.msra.mxu0 %v1271
  %1289 = vmatprep.subr.mxu0 %v1274
  %1290 = vmatpush1.msra.mxu0 %v1273
  %1291 = vmatprep.subr.mxu0 0.0
  %1292 = vmatpush1.msra.mxu0 0.0
  %1293 = vmatprep.subr.mxu0 0.0
  %1294 = vmatpush1.msra.mxu0 0.0
  %1295 = vmatprep.subr.mxu0 0.0
  %1296 = vmatpush1.msra.mxu0 0.0
  %1297 = vmatprep.subr.mxu0 0.0
  %1298 = vmatpush1.msra.mxu0 0.0
  %1299 = vmatprep.subr.mxu0 0.0
  %1300 = vmatpush1.msra.mxu0 0.0
  %1301 = vmatprep.subr.mxu0 0.0
  %1302 = vmatpush1.msra.mxu0 0.0
  %1303 = vmatprep.subr.mxu0 0.0
  %1304 = vmatpush1.msra.mxu0 0.0
  %1305 = vmatprep.subr.mxu0 0.0
  %1306 = vmatpush1.msra.mxu0 0.0
  %1307 = vmatprep.subr.mxu0 0.0
  %1308 = vmatpush1.msra.mxu0 0.0
  %1309 = vmatprep.subr.mxu0 0.0
  %1310 = vmatpush1.msra.mxu0 0.0
  %1311 = vmatprep.subr.mxu0 0.0
  %1312 = vmatpush1.msra.mxu0 0.0
  %1313 = vmatprep.subr.mxu0 0.0
  %1314 = vmatpush1.msra.mxu0 0.0
  %1315 = vmatprep.subr.mxu0 0.0
  %1316 = vmatpush1.msra.mxu0 0.0
  %1317 = vmatprep.subr.mxu0 0.0
  %1318 = vmatpush1.msra.mxu0 0.0
  %1319 = vmatprep.subr.mxu0 0.0
  %1320 = vmatpush1.msra.mxu0 0.0
  %1321 = vmatprep.subr.mxu0 0.0
  %1322 = vmatpush1.msra.mxu0 0.0
  %1323 = vmatprep.subr.mxu0 0.0
  %1324 = vmatpush1.msra.mxu0 0.0
  %1325 = vmatprep.subr.mxu0 0.0
  %1326 = vmatpush1.msra.mxu0 0.0
  %1327 = vmatprep.subr.mxu0 0.0
  %1328 = vmatpush1.msra.mxu0 0.0
  %1329 = vmatprep.subr.mxu0 0.0
  %1330 = vmatpush1.msra.mxu0 0.0
  %1331 = vmatprep.subr.mxu0 0.0
  %1332 = vmatpush1.msra.mxu0 0.0
  %1333 = vmatprep.subr.mxu0 0.0
  %1334 = vmatpush1.msra.mxu0 0.0
  %1335 = vmatprep.subr.mxu0 0.0
  %1336 = vmatpush1.msra.mxu0 0.0
  %1337 = vmatprep.subr.mxu0 0.0
  %1338 = vmatpush1.msra.mxu0 0.0
  %1339 = vmatprep.mubr.f32.mxu0 0.0
  %1340 = vmatmul.mubr.f32.gmra.mrb[0].mxu0 %v228
  %v1341 = vpop.f32.mrb[0].mxu0
  %v1342 = vadd.f32 0.0, %v1341
  %v1343 = vpop.f32.mrb[0].mxu0
  %v1344 = vadd.f32 0.0, %v1343
  %1345 = vmatprep.mubr.f32.mxu0 0.0
  %1346 = vmatmul.mubr.f32.gmra.mrb[0].mxu0 %v231
  %v1347 = vpop.f32.mrb[0].mxu0
  %v1348 = vadd.f32 0.0, %v1347
  %v1349 = vpop.f32.mrb[0].mxu0
  %v1350 = vadd.f32 0.0, %v1349
  %1351 = vmatprep.mubr.f32.mxu0 0.0
  %1352 = vmatmul.mubr.f32.gmra.mrb[0].mxu0 %v234
  %v1353 = vpop.f32.mrb[0].mxu0
  %v1354 = vadd.f32 0.0, %v1353
  %v1355 = vpop.f32.mrb[0].mxu0
  %v1356 = vadd.f32 0.0, %v1355
  %1357 = vmatprep.mubr.f32.mxu0 0.0
  %1358 = vmatmul.mubr.f32.gmra.mrb[0].mxu0 %v237
  %v1359 = vpop.f32.mrb[0].mxu0
  %v1360 = vadd.f32 0.0, %v1359
  %v1361 = vpop.f32.mrb[0].mxu0
  %v1362 = vadd.f32 0.0, %v1361
  %1363 = vdwg.mxu0
  %v1364 = vtanh.pop %v1342
  %v1365 = vtanh.pop %v1344
  %v1366 = vtanh.pop %v1348
  %v1367 = vtanh.pop %v1350
  %v1368 = vtanh.pop %v1354
  %v1369 = vtanh.pop %v1356
  %v1370 = vtanh.pop %v1360
  %v1371 = vtanh.pop %v1362
  %1372 = vst [vmem:[%s562 + $0x40] sm:$0xff] %v1364
  %1373 = vst [vmem:[%s562 + $0x48] sm:$0xff] %v1365
  %1374 = vst [vmem:[%s562 + $0x50] sm:$0xff] %v1366
  %1375 = vst [vmem:[%s562 + $0x58] sm:$0xff] %v1367
  %1376 = vst [vmem:[%s562 + $0x60] sm:$0xff] %v1368
  %1377 = vst [vmem:[%s562 + $0x68] sm:$0xff] %v1369
  %1378 = vst [vmem:[%s562 + $0x70] sm:$0xff] %v1370
  %1379 = vst [vmem:[%s562 + $0x78] sm:$0xff] %v1371
  %1380 = vmatprep.subr.mxu0 %v1365
  %1381 = vmatpush1.msra.mxu0 %v1364
  %1382 = vmatprep.subr.mxu0 %v1367
  %1383 = vmatpush1.msra.mxu0 %v1366
  %1384 = vmatprep.subr.mxu0 %v1369
  %1385 = vmatpush1.msra.mxu0 %v1368
  %1386 = vmatprep.subr.mxu0 %v1371
  %1387 = vmatpush1.msra.mxu0 %v1370
  %1388 = vmatprep.subr.mxu0 0.0
  %1389 = vmatpush1.msra.mxu0 0.0
  %1390 = vmatprep.subr.mxu0 0.0
  %1391 = vmatpush1.msra.mxu0 0.0
  %1392 = vmatprep.subr.mxu0 0.0
  %1393 = vmatpush1.msra.mxu0 0.0
  %1394 = vmatprep.subr.mxu0 0.0
  %1395 = vmatpush1.msra.mxu0 0.0
  %1396 = vmatprep.subr.mxu0 0.0
  %1397 = vmatpush1.msra.mxu0 0.0
  %1398 = vmatprep.subr.mxu0 0.0
  %1399 = vmatpush1.msra.mxu0 0.0
  %1400 = vmatprep.subr.mxu0 0.0
  %1401 = vmatpush1.msra.mxu0 0.0
  %1402 = vmatprep.subr.mxu0 0.0
  %1403 = vmatpush1.msra.mxu0 0.0
  %1404 = vmatprep.subr.mxu0 0.0
  %1405 = vmatpush1.msra.mxu0 0.0
  %1406 = vmatprep.subr.mxu0 0.0
  %1407 = vmatpush1.msra.mxu0 0.0
  %1408 = vmatprep.subr.mxu0 0.0
  %1409 = vmatpush1.msra.mxu0 0.0
  %1410 = vmatprep.subr.mxu0 0.0
  %1411 = vmatpush1.msra.mxu0 0.0
  %1412 = vmatprep.subr.mxu0 0.0
  %1413 = vmatpush1.msra.mxu0 0.0
  %1414 = vmatprep.subr.mxu0 0.0
  %1415 = vmatpush1.msra.mxu0 0.0
  %1416 = vmatprep.subr.mxu0 0.0
  %1417 = vmatpush1.msra.mxu0 0.0
  %1418 = vmatprep.subr.mxu0 0.0
  %1419 = vmatpush1.msra.mxu0 0.0
  %1420 = vmatprep.subr.mxu0 0.0
  %1421 = vmatpush1.msra.mxu0 0.0
  %1422 = vmatprep.subr.mxu0 0.0
  %1423 = vmatpush1.msra.mxu0 0.0
  %1424 = vmatprep.subr.mxu0 0.0
  %1425 = vmatpush1.msra.mxu0 0.0
  %1426 = vmatprep.subr.mxu0 0.0
  %1427 = vmatpush1.msra.mxu0 0.0
  %1428 = vmatprep.subr.mxu0 0.0
  %1429 = vmatpush1.msra.mxu0 0.0
  %1430 = vmatprep.subr.mxu0 0.0
  %1431 = vmatpush1.msra.mxu0 0.0
  %1432 = vmatprep.subr.mxu0 0.0
  %1433 = vmatpush1.msra.mxu0 0.0
  %1434 = vmatprep.subr.mxu0 0.0
  %1435 = vmatpush1.msra.mxu0 0.0
  %1436 = vmatprep.subr.mxu0 0.0
  %1437 = vmatpush1.msra.mxu0 0.0
  %1438 = vmatprep.subr.mxu0 0.0
  %1439 = vmatpush1.msra.mxu0 0.0
  %1440 = vmatprep.subr.mxu0 0.0
  %1441 = vmatpush1.msra.mxu0 0.0
  %1442 = vmatprep.subr.mxu0 0.0
  %1443 = vmatpush1.msra.mxu0 0.0
  %1444 = vmatprep.mubr.f32.mxu0 0.0
  %1445 = vmatmul.mubr.f32.gmra.mrb[0].mxu0 %v347
  %v1446 = vpop.f32.mrb[0].mxu0
  %v1447 = vadd.f32 %v344, %v1446
  %v1448 = vpop.f32.mrb[0].mxu0
  %v1449 = vadd.f32 %v344, %v1448
  %1450 = vdwg.mxu0
  %v1451 = vxor.u32 %v1447, 2147483648
  %v1452 = vxor.u32 %v1449, 2147483648
  %v1453 = vmul.f32 %v1451, 1.442695
  %v1454 = vpow.pop %v1453
  %v1455 = vmul.f32 %v1452, 1.442695
  %v1456 = vpow.pop %v1455
  %v1457 = vadd.f32 %v1454, 1.0
  %v1458 = vadd.f32 %v1456, 1.0
  %v1459 = vrcp.pop %v1457
  %v1460 = vmul.f32 1.0, %v1459
  %v1461 = vrcp.pop %v1458
  %v1462 = vmul.f32 1.0, %v1461
  %v1465 = vcombine.low %v1460, %v1462
  %v1467 = vunpack.c.l.s4 1966171168
  %v1468 = vunpack.c.0.s8 %v1467
  %v1469 = vlaneseq
  %v1470 = vshrl.u32 %v1469, 7
  %v1471 = vsub.s32 %v1468, %v1470
  %v1472 = vrot.slane %v1465, %v1471
  %v1474 = vunpack.c.l.s4 1966171168
  %v1475 = vunpack.c.0.s8 %v1474
  %v1476 = vlaneseq
  %v1477 = vshrl.u32 %v1476, 7
  %v1478 = vsub.s32 %v1475, %v1477
  %v1479 = vrot.slane %v1472, %v1478
  %s1481 = scalar_lea.vmem %s5, 6
  %1482 = vst.msk [vmem:[%s1481] sm:$0x3] %vm28, %v1479
  %1483 = vst.msk [vmem:[%s795] ss:$8 sm:$0x3] %vm28, %v1479
  %1484 = vst.msk [vmem:[%s795] ss:$8 sm:$0x0] %vm28, %v1479
  %s1485 = scalar_lea.vmem %s0, 64
  %v1486 = vld [vmem:[%s1485] sm:$0x1f]
  %v1487 = vld [vmem:[%s1485 + $0x8] sm:$0x1f]
  %v1488 = vld [vmem:[%s1485 + $0x10] sm:$0x1f]
  %v1489 = vld [vmem:[%s1485 + $0x18] sm:$0x1f]
  %1490 = vst [vmem:[#allocation2] sm:$0x1f] %v1486
  %1491 = vst [vmem:[#allocation2 + $0x8] sm:$0x1f] %v1487
  %v1492 = vld [vmem:[#allocation2] sm:$0x7f]
  %v1493 = vld [vmem:[#allocation2 + $0x8] sm:$0x7f]
  %v1495 = vsel %vm98, %v1492, 0
  %v1498 = vsel %vm98, %v1493, 0
  %1500 = vmatprep.subr.mxu0 %v1498
  %1501 = vmatpush1.msra.mxu0 %v1495
  %1502 = vmatprep.subr.mxu0 0.0
  %1503 = vmatpush1.msra.mxu0 0.0
  %1504 = vmatprep.subr.mxu0 0.0
  %1505 = vmatpush1.msra.mxu0 0.0
  %1506 = vmatprep.subr.mxu0 0.0
  %1507 = vmatpush1.msra.mxu0 0.0
  %1508 = vmatprep.subr.mxu0 0.0
  %1509 = vmatpush1.msra.mxu0 0.0
  %1510 = vmatprep.subr.mxu0 0.0
  %1511 = vmatpush1.msra.mxu0 0.0
  %1512 = vmatprep.subr.mxu0 0.0
  %1513 = vmatpush1.msra.mxu0 0.0
  %1514 = vmatprep.subr.mxu0 0.0
  %1515 = vmatpush1.msra.mxu0 0.0
  %1516 = vmatprep.subr.mxu0 0.0
  %1517 = vmatpush1.msra.mxu0 0.0
  %1518 = vmatprep.subr.mxu0 0.0
  %1519 = vmatpush1.msra.mxu0 0.0
  %1520 = vmatprep.subr.mxu0 0.0
  %1521 = vmatpush1.msra.mxu0 0.0
  %1522 = vmatprep.subr.mxu0 0.0
  %1523 = vmatpush1.msra.mxu0 0.0
  %1524 = vmatprep.subr.mxu0 0.0
  %1525 = vmatpush1.msra.mxu0 0.0
  %1526 = vmatprep.subr.mxu0 0.0
  %1527 = vmatpush1.msra.mxu0 0.0
  %1528 = vmatprep.subr.mxu0 0.0
  %1529 = vmatpush1.msra.mxu0 0.0
  %1530 = vmatprep.subr.mxu0 0.0
  %1531 = vmatpush1.msra.mxu0 0.0
  %1532 = vmatprep.subr.mxu0 0.0
  %1533 = vmatpush1.msra.mxu0 0.0
  %1534 = vmatprep.subr.mxu0 0.0
  %1535 = vmatpush1.msra.mxu0 0.0
  %1536 = vmatprep.subr.mxu0 0.0
  %1537 = vmatpush1.msra.mxu0 0.0
  %1538 = vmatprep.subr.mxu0 0.0
  %1539 = vmatpush1.msra.mxu0 0.0
  %1540 = vmatprep.subr.mxu0 0.0
  %1541 = vmatpush1.msra.mxu0 0.0
  %1542 = vmatprep.subr.mxu0 0.0
  %1543 = vmatpush1.msra.mxu0 0.0
  %1544 = vmatprep.subr.mxu0 0.0
  %1545 = vmatpush1.msra.mxu0 0.0
  %1546 = vmatprep.subr.mxu0 0.0
  %1547 = vmatpush1.msra.mxu0 0.0
  %1548 = vmatprep.subr.mxu0 0.0
  %1549 = vmatpush1.msra.mxu0 0.0
  %1550 = vmatprep.subr.mxu0 0.0
  %1551 = vmatpush1.msra.mxu0 0.0
  %1552 = vmatprep.subr.mxu0 0.0
  %1553 = vmatpush1.msra.mxu0 0.0
  %1554 = vmatprep.subr.mxu0 0.0
  %1555 = vmatpush1.msra.mxu0 0.0
  %1556 = vmatprep.subr.mxu0 0.0
  %1557 = vmatpush1.msra.mxu0 0.0
  %1558 = vmatprep.subr.mxu0 0.0
  %1559 = vmatpush1.msra.mxu0 0.0
  %1560 = vmatprep.subr.mxu0 0.0
  %1561 = vmatpush1.msra.mxu0 0.0
  %1562 = vmatprep.subr.mxu0 0.0
  %1563 = vmatpush1.msra.mxu0 0.0
  %1564 = vmatprep.mubr.f32.mxu0 0.0
  %1565 = vmatmul.mubr.f32.gmra.mrb[0].mxu0 %v87
  %v1566 = vpop.f32.mrb[0].mxu0
  %v1567 = vadd.f32 0.0, %v1566
  %v1568 = vpop.f32.mrb[0].mxu0
  %v1569 = vadd.f32 0.0, %v1568
  %1570 = vmatprep.mubr.f32.mxu0 0.0
  %1571 = vmatmul.mubr.f32.gmra.mrb[0].mxu0 %v90
  %v1572 = vpop.f32.mrb[0].mxu0
  %v1573 = vadd.f32 0.0, %v1572
  %v1574 = vpop.f32.mrb[0].mxu0
  %v1575 = vadd.f32 0.0, %v1574
  %1576 = vmatprep.mubr.f32.mxu0 0.0
  %1577 = vmatmul.mubr.f32.gmra.mrb[0].mxu0 %v93
  %v1578 = vpop.f32.mrb[0].mxu0
  %v1579 = vadd.f32 0.0, %v1578
  %v1580 = vpop.f32.mrb[0].mxu0
  %v1581 = vadd.f32 0.0, %v1580
  %1582 = vmatprep.mubr.f32.mxu0 0.0
  %1583 = vmatmul.mubr.f32.gmra.mrb[0].mxu0 %v96
  %v1584 = vpop.f32.mrb[0].mxu0
  %v1585 = vadd.f32 0.0, %v1584
  %v1586 = vpop.f32.mrb[0].mxu0
  %v1587 = vadd.f32 0.0, %v1586
  %1588 = vdwg.mxu0
  %v1589 = vmax.f32 %v1567, 0.0
  %v1590 = vmax.f32 %v1569, 0.0
  %v1591 = vmax.f32 %v1573, 0.0
  %v1592 = vmax.f32 %v1575, 0.0
  %v1593 = vmax.f32 %v1579, 0.0
  %v1594 = vmax.f32 %v1581, 0.0
  %v1595 = vmax.f32 %v1585, 0.0
  %v1596 = vmax.f32 %v1587, 0.0
  %1597 = vst [vmem:[#allocation3] sm:$0xff] %v1589
  %1598 = vst [vmem:[#allocation3 + $0x8] sm:$0xff] %v1590
  %1599 = vst [vmem:[#allocation3 + $0x10] sm:$0xff] %v1591
  %1600 = vst [vmem:[#allocation3 + $0x18] sm:$0xff] %v1592
  %1601 = vst [vmem:[#allocation3 + $0x20] sm:$0xff] %v1593
  %1602 = vst [vmem:[#allocation3 + $0x28] sm:$0xff] %v1594
  %1603 = vst [vmem:[#allocation3 + $0x30] sm:$0xff] %v1595
  %1604 = vst [vmem:[#allocation3 + $0x38] sm:$0xff] %v1596
  %v1605 = vld [vmem:[#allocation3] sm:$0xff]
  %v1606 = vld [vmem:[#allocation3 + $0x8] sm:$0xff]
  %v1607 = vld [vmem:[#allocation3 + $0x10] sm:$0xff]
  %v1608 = vld [vmem:[#allocation3 + $0x18] sm:$0xff]
  %v1609 = vld [vmem:[#allocation3 + $0x20] sm:$0xff]
  %v1610 = vld [vmem:[#allocation3 + $0x28] sm:$0xff]
  %v1611 = vld [vmem:[#allocation3 + $0x30] sm:$0xff]
  %v1612 = vld [vmem:[#allocation3 + $0x38] sm:$0xff]
  %v1613 = vld [vmem:[#allocation3 + $0x40] sm:$0xff]
  %v1614 = vld [vmem:[#allocation3 + $0x48] sm:$0xff]
  %v1615 = vld [vmem:[#allocation3 + $0x50] sm:$0xff]
  %v1616 = vld [vmem:[#allocation3 + $0x58] sm:$0xff]
  %v1617 = vld [vmem:[#allocation3 + $0x60] sm:$0xff]
  %v1618 = vld [vmem:[#allocation3 + $0x68] sm:$0xff]
  %v1619 = vld [vmem:[#allocation3 + $0x70] sm:$0xff]
  %v1620 = vld [vmem:[#allocation3 + $0x78] sm:$0xff]
  %1621 = vmatprep.subr.mxu0 %v1606
  %1622 = vmatpush1.msra.mxu0 %v1605
  %1623 = vmatprep.subr.mxu0 %v1608
  %1624 = vmatpush1.msra.mxu0 %v1607
  %1625 = vmatprep.subr.mxu0 %v1610
  %1626 = vmatpush1.msra.mxu0 %v1609
  %1627 = vmatprep.subr.mxu0 %v1612
  %1628 = vmatpush1.msra.mxu0 %v1611
  %1629 = vmatprep.subr.mxu0 %v1614
  %1630 = vmatpush1.msra.mxu0 %v1613
  %1631 = vmatprep.subr.mxu0 %v1616
  %1632 = vmatpush1.msra.mxu0 %v1615
  %1633 = vmatprep.subr.mxu0 %v1618
  %1634 = vmatpush1.msra.mxu0 %v1617
  %1635 = vmatprep.subr.mxu0 %v1620
  %1636 = vmatpush1.msra.mxu0 %v1619
  %1637 = vmatprep.subr.mxu0 0.0
  %1638 = vmatpush1.msra.mxu0 0.0
  %1639 = vmatprep.subr.mxu0 0.0
  %1640 = vmatpush1.msra.mxu0 0.0
  %1641 = vmatprep.subr.mxu0 0.0
  %1642 = vmatpush1.msra.mxu0 0.0
  %1643 = vmatprep.subr.mxu0 0.0
  %1644 = vmatpush1.msra.mxu0 0.0
  %1645 = vmatprep.subr.mxu0 0.0
  %1646 = vmatpush1.msra.mxu0 0.0
  %1647 = vmatprep.subr.mxu0 0.0
  %1648 = vmatpush1.msra.mxu0 0.0
  %1649 = vmatprep.subr.mxu0 0.0
  %1650 = vmatpush1.msra.mxu0 0.0
  %1651 = vmatprep.subr.mxu0 0.0
  %1652 = vmatpush1.msra.mxu0 0.0
  %1653 = vmatprep.subr.mxu0 0.0
  %1654 = vmatpush1.msra.mxu0 0.0
  %1655 = vmatprep.subr.mxu0 0.0
  %1656 = vmatpush1.msra.mxu0 0.0
  %1657 = vmatprep.subr.mxu0 0.0
  %1658 = vmatpush1.msra.mxu0 0.0
  %1659 = vmatprep.subr.mxu0 0.0
  %1660 = vmatpush1.msra.mxu0 0.0
  %1661 = vmatprep.subr.mxu0 0.0
  %1662 = vmatpush1.msra.mxu0 0.0
  %1663 = vmatprep.subr.mxu0 0.0
  %1664 = vmatpush1.msra.mxu0 0.0
  %1665 = vmatprep.subr.mxu0 0.0
  %1666 = vmatpush1.msra.mxu0 0.0
  %1667 = vmatprep.subr.mxu0 0.0
  %1668 = vmatpush1.msra.mxu0 0.0
  %1669 = vmatprep.subr.mxu0 0.0
  %1670 = vmatpush1.msra.mxu0 0.0
  %1671 = vmatprep.subr.mxu0 0.0
  %1672 = vmatpush1.msra.mxu0 0.0
  %1673 = vmatprep.subr.mxu0 0.0
  %1674 = vmatpush1.msra.mxu0 0.0
  %1675 = vmatprep.subr.mxu0 0.0
  %1676 = vmatpush1.msra.mxu0 0.0
  %1677 = vmatprep.subr.mxu0 0.0
  %1678 = vmatpush1.msra.mxu0 0.0
  %1679 = vmatprep.subr.mxu0 0.0
  %1680 = vmatpush1.msra.mxu0 0.0
  %1681 = vmatprep.subr.mxu0 0.0
  %1682 = vmatpush1.msra.mxu0 0.0
  %1683 = vmatprep.subr.mxu0 0.0
  %1684 = vmatpush1.msra.mxu0 0.0
  %1685 = vmatprep.mubr.f32.mxu0 0.0
  %1686 = vmatmul.mubr.f32.gmra.mrb[0].mxu0 %v228
  %v1687 = vpop.f32.mrb[0].mxu0
  %v1688 = vadd.f32 0.0, %v1687
  %v1689 = vpop.f32.mrb[0].mxu0
  %v1690 = vadd.f32 0.0, %v1689
  %1691 = vmatprep.mubr.f32.mxu0 0.0
  %1692 = vmatmul.mubr.f32.gmra.mrb[0].mxu0 %v231
  %v1693 = vpop.f32.mrb[0].mxu0
  %v1694 = vadd.f32 0.0, %v1693
  %v1695 = vpop.f32.mrb[0].mxu0
  %v1696 = vadd.f32 0.0, %v1695
  %1697 = vmatprep.mubr.f32.mxu0 0.0
  %1698 = vmatmul.mubr.f32.gmra.mrb[0].mxu0 %v234
  %v1699 = vpop.f32.mrb[0].mxu0
  %v1700 = vadd.f32 0.0, %v1699
  %v1701 = vpop.f32.mrb[0].mxu0
  %v1702 = vadd.f32 0.0, %v1701
  %1703 = vmatprep.mubr.f32.mxu0 0.0
  %1704 = vmatmul.mubr.f32.gmra.mrb[0].mxu0 %v237
  %v1705 = vpop.f32.mrb[0].mxu0
  %v1706 = vadd.f32 0.0, %v1705
  %v1707 = vpop.f32.mrb[0].mxu0
  %v1708 = vadd.f32 0.0, %v1707
  %1709 = vdwg.mxu0
  %v1710 = vtanh.pop %v1688
  %v1711 = vtanh.pop %v1690
  %v1712 = vtanh.pop %v1694
  %v1713 = vtanh.pop %v1696
  %v1714 = vtanh.pop %v1700
  %v1715 = vtanh.pop %v1702
  %v1716 = vtanh.pop %v1706
  %v1717 = vtanh.pop %v1708
  %1718 = vst [vmem:[#allocation3 + $0x40] sm:$0xff] %v1710
  %1719 = vst [vmem:[#allocation3 + $0x48] sm:$0xff] %v1711
  %1720 = vst [vmem:[#allocation3 + $0x50] sm:$0xff] %v1712
  %1721 = vst [vmem:[#allocation3 + $0x58] sm:$0xff] %v1713
  %1722 = vst [vmem:[#allocation3 + $0x60] sm:$0xff] %v1714
  %1723 = vst [vmem:[#allocation3 + $0x68] sm:$0xff] %v1715
  %1724 = vst [vmem:[#allocation3 + $0x70] sm:$0xff] %v1716
  %1725 = vst [vmem:[#allocation3 + $0x78] sm:$0xff] %v1717
  %1726 = vmatprep.subr.mxu0 %v1711
  %1727 = vmatpush1.msra.mxu0 %v1710
  %1728 = vmatprep.subr.mxu0 %v1713
  %1729 = vmatpush1.msra.mxu0 %v1712
  %1730 = vmatprep.subr.mxu0 %v1715
  %1731 = vmatpush1.msra.mxu0 %v1714
  %1732 = vmatprep.subr.mxu0 %v1717
  %1733 = vmatpush1.msra.mxu0 %v1716
  %1734 = vmatprep.subr.mxu0 0.0
  %1735 = vmatpush1.msra.mxu0 0.0
  %1736 = vmatprep.subr.mxu0 0.0
  %1737 = vmatpush1.msra.mxu0 0.0
  %1738 = vmatprep.subr.mxu0 0.0
  %1739 = vmatpush1.msra.mxu0 0.0
  %1740 = vmatprep.subr.mxu0 0.0
  %1741 = vmatpush1.msra.mxu0 0.0
  %1742 = vmatprep.subr.mxu0 0.0
  %1743 = vmatpush1.msra.mxu0 0.0
  %1744 = vmatprep.subr.mxu0 0.0
  %1745 = vmatpush1.msra.mxu0 0.0
  %1746 = vmatprep.subr.mxu0 0.0
  %1747 = vmatpush1.msra.mxu0 0.0
  %1748 = vmatprep.subr.mxu0 0.0
  %1749 = vmatpush1.msra.mxu0 0.0
  %1750 = vmatprep.subr.mxu0 0.0
  %1751 = vmatpush1.msra.mxu0 0.0
  %1752 = vmatprep.subr.mxu0 0.0
  %1753 = vmatpush1.msra.mxu0 0.0
  %1754 = vmatprep.subr.mxu0 0.0
  %1755 = vmatpush1.msra.mxu0 0.0
  %1756 = vmatprep.subr.mxu0 0.0
  %1757 = vmatpush1.msra.mxu0 0.0
  %1758 = vmatprep.subr.mxu0 0.0
  %1759 = vmatpush1.msra.mxu0 0.0
  %1760 = vmatprep.subr.mxu0 0.0
  %1761 = vmatpush1.msra.mxu0 0.0
  %1762 = vmatprep.subr.mxu0 0.0
  %1763 = vmatpush1.msra.mxu0 0.0
  %1764 = vmatprep.subr.mxu0 0.0
  %1765 = vmatpush1.msra.mxu0 0.0
  %1766 = vmatprep.subr.mxu0 0.0
  %1767 = vmatpush1.msra.mxu0 0.0
  %1768 = vmatprep.subr.mxu0 0.0
  %1769 = vmatpush1.msra.mxu0 0.0
  %1770 = vmatprep.subr.mxu0 0.0
  %1771 = vmatpush1.msra.mxu0 0.0
  %1772 = vmatprep.subr.mxu0 0.0
  %1773 = vmatpush1.msra.mxu0 0.0
  %1774 = vmatprep.subr.mxu0 0.0
  %1775 = vmatpush1.msra.mxu0 0.0
  %1776 = vmatprep.subr.mxu0 0.0
  %1777 = vmatpush1.msra.mxu0 0.0
  %1778 = vmatprep.subr.mxu0 0.0
  %1779 = vmatpush1.msra.mxu0 0.0
  %1780 = vmatprep.subr.mxu0 0.0
  %1781 = vmatpush1.msra.mxu0 0.0
  %1782 = vmatprep.subr.mxu0 0.0
  %1783 = vmatpush1.msra.mxu0 0.0
  %1784 = vmatprep.subr.mxu0 0.0
  %1785 = vmatpush1.msra.mxu0 0.0
  %1786 = vmatprep.subr.mxu0 0.0
  %1787 = vmatpush1.msra.mxu0 0.0
  %1788 = vmatprep.subr.mxu0 0.0
  %1789 = vmatpush1.msra.mxu0 0.0
  %1790 = vmatprep.mubr.f32.mxu0 0.0
  %1791 = vmatmul.mubr.f32.gmra.mrb[0].mxu0 %v347
  %v1792 = vpop.f32.mrb[0].mxu0
  %v1793 = vadd.f32 %v344, %v1792
  %v1794 = vpop.f32.mrb[0].mxu0
  %v1795 = vadd.f32 %v344, %v1794
  %1796 = vdwg.mxu0
  %v1797 = vxor.u32 %v1793, 2147483648
  %v1798 = vxor.u32 %v1795, 2147483648
  %v1799 = vmul.f32 %v1797, 1.442695
  %v1800 = vpow.pop %v1799
  %v1801 = vmul.f32 %v1798, 1.442695
  %v1802 = vpow.pop %v1801
  %v1803 = vadd.f32 %v1800, 1.0
  %v1804 = vadd.f32 %v1802, 1.0
  %v1805 = vrcp.pop %v1803
  %v1806 = vmul.f32 1.0, %v1805
  %v1807 = vrcp.pop %v1804
  %v1808 = vmul.f32 1.0, %v1807
  %v1811 = vcombine.low %v1806, %v1808
  %v1813 = vunpack.c.l.s4 1966171168
  %v1814 = vunpack.c.0.s8 %v1813
  %v1815 = vlaneseq
  %v1816 = vshrl.u32 %v1815, 7
  %v1817 = vsub.s32 %v1814, %v1816
  %v1818 = vrot.slane %v1811, %v1817
  %v1820 = vunpack.c.l.s4 1966171168
  %v1821 = vunpack.c.0.s8 %v1820
  %v1822 = vlaneseq
  %v1823 = vshrl.u32 %v1822, 7
  %v1824 = vsub.s32 %v1821, %v1823
  %v1825 = vrot.slane %v1818, %v1824
  %s1827 = scalar_lea.vmem %s5, 8
  %1828 = vst.msk [vmem:[%s1827] sm:$0x3] %vm28, %v1825
  %1829 = vst.msk [vmem:[%s451] ss:$8 sm:$0x3] %vm28, %v1825
  %1830 = vst.msk [vmem:[%s451] ss:$8 sm:$0x0] %vm28, %v1825
  %1831 = vst [vmem:[%s454] sm:$0x1f] %v1488
  %1832 = vst [vmem:[%s454 + $0x8] sm:$0x1f] %v1489
  %v1833 = vld [vmem:[%s454] sm:$0x7f]
  %v1834 = vld [vmem:[%s454 + $0x8] sm:$0x7f]
  %v1836 = vsel %vm98, %v1833, 0
  %v1839 = vsel %vm98, %v1834, 0
  %1841 = vmatprep.subr.mxu0 %v1839
  %1842 = vmatpush1.msra.mxu0 %v1836
  %1843 = vmatprep.subr.mxu0 0.0
  %1844 = vmatpush1.msra.mxu0 0.0
  %1845 = vmatprep.subr.mxu0 0.0
  %1846 = vmatpush1.msra.mxu0 0.0
  %1847 = vmatprep.subr.mxu0 0.0
  %1848 = vmatpush1.msra.mxu0 0.0
  %1849 = vmatprep.subr.mxu0 0.0
  %1850 = vmatpush1.msra.mxu0 0.0
  %1851 = vmatprep.subr.mxu0 0.0
  %1852 = vmatpush1.msra.mxu0 0.0
  %1853 = vmatprep.subr.mxu0 0.0
  %1854 = vmatpush1.msra.mxu0 0.0
  %1855 = vmatprep.subr.mxu0 0.0
  %1856 = vmatpush1.msra.mxu0 0.0
  %1857 = vmatprep.subr.mxu0 0.0
  %1858 = vmatpush1.msra.mxu0 0.0
  %1859 = vmatprep.subr.mxu0 0.0
  %1860 = vmatpush1.msra.mxu0 0.0
  %1861 = vmatprep.subr.mxu0 0.0
  %1862 = vmatpush1.msra.mxu0 0.0
  %1863 = vmatprep.subr.mxu0 0.0
  %1864 = vmatpush1.msra.mxu0 0.0
  %1865 = vmatprep.subr.mxu0 0.0
  %1866 = vmatpush1.msra.mxu0 0.0
  %1867 = vmatprep.subr.mxu0 0.0
  %1868 = vmatpush1.msra.mxu0 0.0
  %1869 = vmatprep.subr.mxu0 0.0
  %1870 = vmatpush1.msra.mxu0 0.0
  %1871 = vmatprep.subr.mxu0 0.0
  %1872 = vmatpush1.msra.mxu0 0.0
  %1873 = vmatprep.subr.mxu0 0.0
  %1874 = vmatpush1.msra.mxu0 0.0
  %1875 = vmatprep.subr.mxu0 0.0
  %1876 = vmatpush1.msra.mxu0 0.0
  %1877 = vmatprep.subr.mxu0 0.0
  %1878 = vmatpush1.msra.mxu0 0.0
  %1879 = vmatprep.subr.mxu0 0.0
  %1880 = vmatpush1.msra.mxu0 0.0
  %1881 = vmatprep.subr.mxu0 0.0
  %1882 = vmatpush1.msra.mxu0 0.0
  %1883 = vmatprep.subr.mxu0 0.0
  %1884 = vmatpush1.msra.mxu0 0.0
  %1885 = vmatprep.subr.mxu0 0.0
  %1886 = vmatpush1.msra.mxu0 0.0
  %1887 = vmatprep.subr.mxu0 0.0
  %1888 = vmatpush1.msra.mxu0 0.0
  %1889 = vmatprep.subr.mxu0 0.0
  %1890 = vmatpush1.msra.mxu0 0.0
  %1891 = vmatprep.subr.mxu0 0.0
  %1892 = vmatpush1.msra.mxu0 0.0
  %1893 = vmatprep.subr.mxu0 0.0
  %1894 = vmatpush1.msra.mxu0 0.0
  %1895 = vmatprep.subr.mxu0 0.0
  %1896 = vmatpush1.msra.mxu0 0.0
  %1897 = vmatprep.subr.mxu0 0.0
  %1898 = vmatpush1.msra.mxu0 0.0
  %1899 = vmatprep.subr.mxu0 0.0
  %1900 = vmatpush1.msra.mxu0 0.0
  %1901 = vmatprep.subr.mxu0 0.0
  %1902 = vmatpush1.msra.mxu0 0.0
  %1903 = vmatprep.subr.mxu0 0.0
  %1904 = vmatpush1.msra.mxu0 0.0
  %1905 = vmatprep.mubr.f32.mxu0 0.0
  %1906 = vmatmul.mubr.f32.gmra.mrb[0].mxu0 %v87
  %v1907 = vpop.f32.mrb[0].mxu0
  %v1908 = vadd.f32 0.0, %v1907
  %v1909 = vpop.f32.mrb[0].mxu0
  %v1910 = vadd.f32 0.0, %v1909
  %1911 = vmatprep.mubr.f32.mxu0 0.0
  %1912 = vmatmul.mubr.f32.gmra.mrb[0].mxu0 %v90
  %v1913 = vpop.f32.mrb[0].mxu0
  %v1914 = vadd.f32 0.0, %v1913
  %v1915 = vpop.f32.mrb[0].mxu0
  %v1916 = vadd.f32 0.0, %v1915
  %1917 = vmatprep.mubr.f32.mxu0 0.0
  %1918 = vmatmul.mubr.f32.gmra.mrb[0].mxu0 %v93
  %v1919 = vpop.f32.mrb[0].mxu0
  %v1920 = vadd.f32 0.0, %v1919
  %v1921 = vpop.f32.mrb[0].mxu0
  %v1922 = vadd.f32 0.0, %v1921
  %1923 = vmatprep.mubr.f32.mxu0 0.0
  %1924 = vmatmul.mubr.f32.gmra.mrb[0].mxu0 %v96
  %v1925 = vpop.f32.mrb[0].mxu0
  %v1926 = vadd.f32 0.0, %v1925
  %v1927 = vpop.f32.mrb[0].mxu0
  %v1928 = vadd.f32 0.0, %v1927
  %1929 = vdwg.mxu0
  %v1930 = vmax.f32 %v1908, 0.0
  %v1931 = vmax.f32 %v1910, 0.0
  %v1932 = vmax.f32 %v1914, 0.0
  %v1933 = vmax.f32 %v1916, 0.0
  %v1934 = vmax.f32 %v1920, 0.0
  %v1935 = vmax.f32 %v1922, 0.0
  %v1936 = vmax.f32 %v1926, 0.0
  %v1937 = vmax.f32 %v1928, 0.0
  %1938 = vst [vmem:[%s562] sm:$0xff] %v1930
  %1939 = vst [vmem:[%s562 + $0x8] sm:$0xff] %v1931
  %1940 = vst [vmem:[%s562 + $0x10] sm:$0xff] %v1932
  %1941 = vst [vmem:[%s562 + $0x18] sm:$0xff] %v1933
  %1942 = vst [vmem:[%s562 + $0x20] sm:$0xff] %v1934
  %1943 = vst [vmem:[%s562 + $0x28] sm:$0xff] %v1935
  %1944 = vst [vmem:[%s562 + $0x30] sm:$0xff] %v1936
  %1945 = vst [vmem:[%s562 + $0x38] sm:$0xff] %v1937
  %v1946 = vld [vmem:[%s562] sm:$0xff]
  %v1947 = vld [vmem:[%s562 + $0x8] sm:$0xff]
  %v1948 = vld [vmem:[%s562 + $0x10] sm:$0xff]
  %v1949 = vld [vmem:[%s562 + $0x18] sm:$0xff]
  %v1950 = vld [vmem:[%s562 + $0x20] sm:$0xff]
  %v1951 = vld [vmem:[%s562 + $0x28] sm:$0xff]
  %v1952 = vld [vmem:[%s562 + $0x30] sm:$0xff]
  %v1953 = vld [vmem:[%s562 + $0x38] sm:$0xff]
  %v1954 = vld [vmem:[%s562 + $0x40] sm:$0xff]
  %v1955 = vld [vmem:[%s562 + $0x48] sm:$0xff]
  %v1956 = vld [vmem:[%s562 + $0x50] sm:$0xff]
  %v1957 = vld [vmem:[%s562 + $0x58] sm:$0xff]
  %v1958 = vld [vmem:[%s562 + $0x60] sm:$0xff]
  %v1959 = vld [vmem:[%s562 + $0x68] sm:$0xff]
  %v1960 = vld [vmem:[%s562 + $0x70] sm:$0xff]
  %v1961 = vld [vmem:[%s562 + $0x78] sm:$0xff]
  %1962 = vmatprep.subr.mxu0 %v1947
  %1963 = vmatpush1.msra.mxu0 %v1946
  %1964 = vmatprep.subr.mxu0 %v1949
  %1965 = vmatpush1.msra.mxu0 %v1948
  %1966 = vmatprep.subr.mxu0 %v1951
  %1967 = vmatpush1.msra.mxu0 %v1950
  %1968 = vmatprep.subr.mxu0 %v1953
  %1969 = vmatpush1.msra.mxu0 %v1952
  %1970 = vmatprep.subr.mxu0 %v1955
  %1971 = vmatpush1.msra.mxu0 %v1954
  %1972 = vmatprep.subr.mxu0 %v1957
  %1973 = vmatpush1.msra.mxu0 %v1956
  %1974 = vmatprep.subr.mxu0 %v1959
  %1975 = vmatpush1.msra.mxu0 %v1958
  %1976 = vmatprep.subr.mxu0 %v1961
  %1977 = vmatpush1.msra.mxu0 %v1960
  %1978 = vmatprep.subr.mxu0 0.0
  %1979 = vmatpush1.msra.mxu0 0.0
  %1980 = vmatprep.subr.mxu0 0.0
  %1981 = vmatpush1.msra.mxu0 0.0
  %1982 = vmatprep.subr.mxu0 0.0
  %1983 = vmatpush1.msra.mxu0 0.0
  %1984 = vmatprep.subr.mxu0 0.0
  %1985 = vmatpush1.msra.mxu0 0.0
  %1986 = vmatprep.subr.mxu0 0.0
  %1987 = vmatpush1.msra.mxu0 0.0
  %1988 = vmatprep.subr.mxu0 0.0
  %1989 = vmatpush1.msra.mxu0 0.0
  %1990 = vmatprep.subr.mxu0 0.0
  %1991 = vmatpush1.msra.mxu0 0.0
  %1992 = vmatprep.subr.mxu0 0.0
  %1993 = vmatpush1.msra.mxu0 0.0
  %1994 = vmatprep.subr.mxu0 0.0
  %1995 = vmatpush1.msra.mxu0 0.0
  %1996 = vmatprep.subr.mxu0 0.0
  %1997 = vmatpush1.msra.mxu0 0.0
  %1998 = vmatprep.subr.mxu0 0.0
  %1999 = vmatpush1.msra.mxu0 0.0
  %2000 = vmatprep.subr.mxu0 0.0
  %2001 = vmatpush1.msra.mxu0 0.0
  %2002 = vmatprep.subr.mxu0 0.0
  %2003 = vmatpush1.msra.mxu0 0.0
  %2004 = vmatprep.subr.mxu0 0.0
  %2005 = vmatpush1.msra.mxu0 0.0
  %2006 = vmatprep.subr.mxu0 0.0
  %2007 = vmatpush1.msra.mxu0 0.0
  %2008 = vmatprep.subr.mxu0 0.0
  %2009 = vmatpush1.msra.mxu0 0.0
  %2010 = vmatprep.subr.mxu0 0.0
  %2011 = vmatpush1.msra.mxu0 0.0
  %2012 = vmatprep.subr.mxu0 0.0
  %2013 = vmatpush1.msra.mxu0 0.0
  %2014 = vmatprep.subr.mxu0 0.0
  %2015 = vmatpush1.msra.mxu0 0.0
  %2016 = vmatprep.subr.mxu0 0.0
  %2017 = vmatpush1.msra.mxu0 0.0
  %2018 = vmatprep.subr.mxu0 0.0
  %2019 = vmatpush1.msra.mxu0 0.0
  %2020 = vmatprep.subr.mxu0 0.0
  %2021 = vmatpush1.msra.mxu0 0.0
  %2022 = vmatprep.subr.mxu0 0.0
  %2023 = vmatpush1.msra.mxu0 0.0
  %2024 = vmatprep.subr.mxu0 0.0
  %2025 = vmatpush1.msra.mxu0 0.0
  %2026 = vmatprep.mubr.f32.mxu0 0.0
  %2027 = vmatmul.mubr.f32.gmra.mrb[0].mxu0 %v228
  %v2028 = vpop.f32.mrb[0].mxu0
  %v2029 = vadd.f32 0.0, %v2028
  %v2030 = vpop.f32.mrb[0].mxu0
  %v2031 = vadd.f32 0.0, %v2030
  %2032 = vmatprep.mubr.f32.mxu0 0.0
  %2033 = vmatmul.mubr.f32.gmra.mrb[0].mxu0 %v231
  %v2034 = vpop.f32.mrb[0].mxu0
  %v2035 = vadd.f32 0.0, %v2034
  %v2036 = vpop.f32.mrb[0].mxu0
  %v2037 = vadd.f32 0.0, %v2036
  %2038 = vmatprep.mubr.f32.mxu0 0.0
  %2039 = vmatmul.mubr.f32.gmra.mrb[0].mxu0 %v234
  %v2040 = vpop.f32.mrb[0].mxu0
  %v2041 = vadd.f32 0.0, %v2040
  %v2042 = vpop.f32.mrb[0].mxu0
  %v2043 = vadd.f32 0.0, %v2042
  %2044 = vmatprep.mubr.f32.mxu0 0.0
  %2045 = vmatmul.mubr.f32.gmra.mrb[0].mxu0 %v237
  %v2046 = vpop.f32.mrb[0].mxu0
  %v2047 = vadd.f32 0.0, %v2046
  %v2048 = vpop.f32.mrb[0].mxu0
  %v2049 = vadd.f32 0.0, %v2048
  %2050 = vdwg.mxu0
  %v2051 = vtanh.pop %v2029
  %v2052 = vtanh.pop %v2031
  %v2053 = vtanh.pop %v2035
  %v2054 = vtanh.pop %v2037
  %v2055 = vtanh.pop %v2041
  %v2056 = vtanh.pop %v2043
  %v2057 = vtanh.pop %v2047
  %v2058 = vtanh.pop %v2049
  %2059 = vst [vmem:[%s562 + $0x40] sm:$0xff] %v2051
  %2060 = vst [vmem:[%s562 + $0x48] sm:$0xff] %v2052
  %2061 = vst [vmem:[%s562 + $0x50] sm:$0xff] %v2053
  %2062 = vst [vmem:[%s562 + $0x58] sm:$0xff] %v2054
  %2063 = vst [vmem:[%s562 + $0x60] sm:$0xff] %v2055
  %2064 = vst [vmem:[%s562 + $0x68] sm:$0xff] %v2056
  %2065 = vst [vmem:[%s562 + $0x70] sm:$0xff] %v2057
  %2066 = vst [vmem:[%s562 + $0x78] sm:$0xff] %v2058
  %2067 = vmatprep.subr.mxu0 %v2052
  %2068 = vmatpush1.msra.mxu0 %v2051
  %2069 = vmatprep.subr.mxu0 %v2054
  %2070 = vmatpush1.msra.mxu0 %v2053
  %2071 = vmatprep.subr.mxu0 %v2056
  %2072 = vmatpush1.msra.mxu0 %v2055
  %2073 = vmatprep.subr.mxu0 %v2058
  %2074 = vmatpush1.msra.mxu0 %v2057
  %2075 = vmatprep.subr.mxu0 0.0
  %2076 = vmatpush1.msra.mxu0 0.0
  %2077 = vmatprep.subr.mxu0 0.0
  %2078 = vmatpush1.msra.mxu0 0.0
  %2079 = vmatprep.subr.mxu0 0.0
  %2080 = vmatpush1.msra.mxu0 0.0
  %2081 = vmatprep.subr.mxu0 0.0
  %2082 = vmatpush1.msra.mxu0 0.0
  %2083 = vmatprep.subr.mxu0 0.0
  %2084 = vmatpush1.msra.mxu0 0.0
  %2085 = vmatprep.subr.mxu0 0.0
  %2086 = vmatpush1.msra.mxu0 0.0
  %2087 = vmatprep.subr.mxu0 0.0
  %2088 = vmatpush1.msra.mxu0 0.0
  %2089 = vmatprep.subr.mxu0 0.0
  %2090 = vmatpush1.msra.mxu0 0.0
  %2091 = vmatprep.subr.mxu0 0.0
  %2092 = vmatpush1.msra.mxu0 0.0
  %2093 = vmatprep.subr.mxu0 0.0
  %2094 = vmatpush1.msra.mxu0 0.0
  %2095 = vmatprep.subr.mxu0 0.0
  %2096 = vmatpush1.msra.mxu0 0.0
  %2097 = vmatprep.subr.mxu0 0.0
  %2098 = vmatpush1.msra.mxu0 0.0
  %2099 = vmatprep.subr.mxu0 0.0
  %2100 = vmatpush1.msra.mxu0 0.0
  %2101 = vmatprep.subr.mxu0 0.0
  %2102 = vmatpush1.msra.mxu0 0.0
  %2103 = vmatprep.subr.mxu0 0.0
  %2104 = vmatpush1.msra.mxu0 0.0
  %2105 = vmatprep.subr.mxu0 0.0
  %2106 = vmatpush1.msra.mxu0 0.0
  %2107 = vmatprep.subr.mxu0 0.0
  %2108 = vmatpush1.msra.mxu0 0.0
  %2109 = vmatprep.subr.mxu0 0.0
  %2110 = vmatpush1.msra.mxu0 0.0
  %2111 = vmatprep.subr.mxu0 0.0
  %2112 = vmatpush1.msra.mxu0 0.0
  %2113 = vmatprep.subr.mxu0 0.0
  %2114 = vmatpush1.msra.mxu0 0.0
  %2115 = vmatprep.subr.mxu0 0.0
  %2116 = vmatpush1.msra.mxu0 0.0
  %2117 = vmatprep.subr.mxu0 0.0
  %2118 = vmatpush1.msra.mxu0 0.0
  %2119 = vmatprep.subr.mxu0 0.0
  %2120 = vmatpush1.msra.mxu0 0.0
  %2121 = vmatprep.subr.mxu0 0.0
  %2122 = vmatpush1.msra.mxu0 0.0
  %2123 = vmatprep.subr.mxu0 0.0
  %2124 = vmatpush1.msra.mxu0 0.0
  %2125 = vmatprep.subr.mxu0 0.0
  %2126 = vmatpush1.msra.mxu0 0.0
  %2127 = vmatprep.subr.mxu0 0.0
  %2128 = vmatpush1.msra.mxu0 0.0
  %2129 = vmatprep.subr.mxu0 0.0
  %2130 = vmatpush1.msra.mxu0 0.0
  %2131 = vmatprep.mubr.f32.mxu0 0.0
  %2132 = vmatmul.mubr.f32.gmra.mrb[0].mxu0 %v347
  %v2133 = vpop.f32.mrb[0].mxu0
  %v2134 = vadd.f32 %v344, %v2133
  %v2135 = vpop.f32.mrb[0].mxu0
  %v2136 = vadd.f32 %v344, %v2135
  %2137 = vdwg.mxu0
  %v2138 = vxor.u32 %v2134, 2147483648
  %v2139 = vxor.u32 %v2136, 2147483648
  %v2140 = vmul.f32 %v2138, 1.442695
  %v2141 = vpow.pop %v2140
  %v2142 = vmul.f32 %v2139, 1.442695
  %v2143 = vpow.pop %v2142
  %v2144 = vadd.f32 %v2141, 1.0
  %v2145 = vadd.f32 %v2143, 1.0
  %v2146 = vrcp.pop %v2144
  %v2147 = vmul.f32 1.0, %v2146
  %v2148 = vrcp.pop %v2145
  %v2149 = vmul.f32 1.0, %v2148
  %v2152 = vcombine.low %v2147, %v2149
  %v2154 = vunpack.c.l.s4 1966171168
  %v2155 = vunpack.c.0.s8 %v2154
  %v2156 = vlaneseq
  %v2157 = vshrl.u32 %v2156, 7
  %v2158 = vsub.s32 %v2155, %v2157
  %v2159 = vrot.slane %v2152, %v2158
  %v2161 = vunpack.c.l.s4 1966171168
  %v2162 = vunpack.c.0.s8 %v2161
  %v2163 = vlaneseq
  %v2164 = vshrl.u32 %v2163, 7
  %v2165 = vsub.s32 %v2162, %v2164
  %v2166 = vrot.slane %v2159, %v2165
  %s2168 = scalar_lea.vmem %s5, 10
  %2169 = vst.msk [vmem:[%s2168] sm:$0x3] %vm28, %v2166
  %2170 = vst.msk [vmem:[%s795] ss:$8 sm:$0x3] %vm28, %v2166
  %2171 = vst.msk [vmem:[%s795] ss:$8 sm:$0x0] %vm28, %v2166
  // Predicated region
  $region22: #{reconstructor_forward.1} parent=0 // pred_check
    _
  $region23: #{reconstructor_forward.1} parent=0 // pred_check_branch
    %2173 = sbr.rel (0) target = $region25
  $region24: #{reconstructor_forward.1} parent=0 // pred_region
    _
  $region25: #{reconstructor_forward.1} parent=0 // pred_fallthru
    _
  // Predicated region
  $region26: #{reconstructor_forward.1} parent=0 // pred_check
    _
  $region27: #{reconstructor_forward.1} parent=0 // pred_check_branch
    %2175 = sbr.rel (0) target = $region29
  $region28: #{reconstructor_forward.1} parent=0 // pred_region
    _
  $region29: #{reconstructor_forward.1} parent=0 // pred_fallthru
    _

</llo_original>
